<compile_context>
chip_gen: v5e
topology: v5e:2x2
jax: 0.10.0
libtpu: 0.0.40
codegen_flags: <defaults>
</compile_context>

<pallas_src>
import math

import jax
import jax.numpy as jnp
from jax import lax
from jax.experimental import pallas as pl
from jax.experimental.pallas import tpu as pltpu

LOG_2PI = math.log(2.0 * math.pi)
_LANES = 128
_MLP_WIDTH = 256          # hidden MLP width (200 in the reference, zero-padded)


def _round_up(a, m):
    return ((a + m - 1) // m) * m


def _dot(a, b):
    return jnp.dot(a, b, preferred_element_type=jnp.float32)


def _bf16(x):
    return x.astype(jnp.bfloat16)


def _default_vmem_limit():
    # ~5/8 of physical VMEM per generation (v7x: 64 MiB -> 40 MiB,
    # v5e/v6e: 128 MiB -> 80 MiB), with a safe fallback.
    try:
        cap = int(pltpu.get_tpu_info().vmem_capacity_bytes)
        return max(32 * 1024 * 1024, min(cap * 5 // 8, 96 * 1024 * 1024))
    except Exception:
        return 48 * 1024 * 1024


def _pick_row_tile(n):
    """Row tile (multiple of 8, <= 256): minimise padded waste, prefer >= 2
    grid steps (keeps both v7x TensorCores busy), then the largest tile."""
    best_key, best = None, (8, _round_up(max(n, 1), 8))
    for tm in range(8, 257, 8):
        n_pad = _round_up(max(n, 1), tm)
        key = (n_pad - n, 0 if n_pad // tm >= 2 else 1, -tm)
        if best_key is None or key < best_key:
            best_key, best = key, (tm, n_pad)
    return best


def _const_spec(a):
    nd = a.ndim
    return pl.BlockSpec(a.shape, lambda i: (0,) * nd)


# ----------------------------------------------------------------------------
# Kernel 1: encoder forward (mu, log_sigma) + VAE encoder loss (one pass)
# ----------------------------------------------------------------------------
def _make_encoder_kernel(hidden_size, d_valid, out_width):
    del hidden_size  # shapes come from the refs

    def kernel(x_ref, eps_ref,
               we1, be1, we2, be2, wmu, bmu, wls, bls,
               dw1, db1, dw2, db2, dw3, db3,
               mu_ref, logsig_ref, loss_ref):
        x = x_ref[...]
        rows, d_pad = x.shape

        # encoder MLP (bf16 weights, f32 accumulation)
        e1 = jnp.tanh(_dot(_bf16(x), we1[...]) + be1[...])
        e2 = jnp.tanh(_dot(_bf16(e1), we2[...]) + be2[...])
        mu = _dot(_bf16(e2), wmu[...]) + bmu[...]
        logsig = _dot(_bf16(e2), wls[...]) + bls[...]
        sigma = jnp.exp(logsig)

        # reparameterised sample + decoder forward -> VAE encoder loss
        h = mu + sigma * eps_ref[...]
        t1 = jnp.tanh(_dot(_bf16(h), dw1[...]) + db1[...])
        t2 = jnp.tanh(_dot(_bf16(t1), dw2[...]) + db2[...])
        z = _dot(_bf16(t2), dw3[...]) + db3[...]

        # Bernoulli log-lik in logit space: x*z - softplus(z)
        e = jnp.exp(-jnp.abs(z))
        ll = x * z - (jnp.maximum(z, 0.0) + jnp.log(1.0 + e))
        if d_pad != d_valid:   # mask zero-padded output lanes
            ll = ll * (lax.broadcasted_iota(jnp.int32, (1, d_pad), 1)
                       < d_valid).astype(jnp.float32)
        log_PxGh = jnp.sum(ll, axis=-1, keepdims=True)
        dkl = 0.5 * jnp.sum(mu * mu + sigma * sigma - 1.0 - 2.0 * logsig,
                            axis=-1, keepdims=True)
        loss = -log_PxGh + dkl

        mu_ref[...] = mu
        logsig_ref[...] = logsig
        loss_ref[...] = jnp.broadcast_to(loss, (rows, out_width))  # lane-dense

    return kernel


# ----------------------------------------------------------------------------
# Kernel 2: fused annealed-importance / HMC chain (rolled beta loop).
# ----------------------------------------------------------------------------
def _make_chain_kernel(betas, epsilons, L, hidden_size, d_valid, out_width):
    Kb = len(betas)
    H = hidden_size
    # per-transition epsilon (transition k uses epsilons[k]; last uses [-1])
    eps_table = [float(epsilons[k]) if k < Kb - 1 else float(epsilons[-1])
                 for k in range(Kb)]
    # log-w increment factor for transition k (0 for the final transition)
    dbetas = [betas[k + 1] - betas[k] if k + 1 < Kb else 0.0 for k in range(Kb)]

    def kernel(x_ref, mu_ref, logsig_ref, eps0_ref, mom_ref, unif_ref,
               w1, b1, w2, b2, w3, b3, w1t, w2t, w3t,
               out_ref, sched):
        # schedule table -> SMEM (constant stores, dynamic reads in the loop)
        for j in range(Kb):
            sched[0, j] = jnp.float32(betas[j])
            sched[1, j] = jnp.float32(eps_table[j])
            sched[2, j] = jnp.float32(dbetas[j])

        rows, d_pad = x_ref.shape
        mu = mu_ref[...]
        logsig = logsig_ref[...]
        inv_sig = jnp.exp(-logsig)
        if d_pad != d_valid:
            dmask = (lax.broadcasted_iota(jnp.int32, (1, d_pad), 1)
                     < d_valid).astype(jnp.float32)
        else:
            dmask = None
        lane = lax.broadcasted_iota(jnp.int32, (1, out_width), 1)
        half_log2pi_H = 0.5 * LOG_2PI * H

        def eval_at(hq):
            """Decoder fwd + analytic bwd at hq.  Returns the beta-independent
            log P(x,h), log Q(h|x) and their gradients wrt h."""
            x = x_ref[...]
            t1 = jnp.tanh(_dot(_bf16(hq), w1[...]) + b1[...])
            t2 = jnp.tanh(_dot(_bf16(t1), w2[...]) + b2[...])
            z = _dot(_bf16(t2), w3[...]) + b3[...]
            e = jnp.exp(-jnp.abs(z))                 # one EUP exp over D
            ll = x * z - (jnp.maximum(z, 0.0) + jnp.log(1.0 + e))
            if dmask is not None:
                ll = ll * dmask
            lp = (jnp.sum(ll, axis=-1, keepdims=True)
                  - 0.5 * jnp.sum(hq * hq, axis=-1, keepdims=True)
                  - half_log2pi_H)
            diff = (hq - mu) * inv_sig
            lq = jnp.sum(-0.5 * diff * diff - 0.5 * LOG_2PI - logsig,
                         axis=-1, keepdims=True)
            # analytic d/dh (replaces torch.autograd.grad), pre-transposed bf16
            inv1pe = pl.reciprocal(1.0 + e, approx=True)
            p_sig = jnp.where(z >= 0.0, inv1pe, e * inv1pe)     # sigmoid(z)
            dz = x - p_sig
            da2 = _dot(_bf16(dz), w3t[...]) * (1.0 - t2 * t2)
            da1 = _dot(_bf16(da2), w2t[...]) * (1.0 - t1 * t1)
            glp = _dot(_bf16(da1), w1t[...]) - hq
            glq = -diff * inv_sig
            return lp, lq, glp, glq

        # initial sample h ~ q(h|x): one fused eval gives the betas[0]
        # importance weight terms AND the gradient for the first half-kick.
        h0 = mu + jnp.exp(logsig) * eps0_ref[...]
        lp0, lq0, glp0, glq0 = eval_at(h0)
        log_w0 = (betas[1] - betas[0]) * (lp0 - lq0)
        packed0 = jnp.zeros((rows, out_width), jnp.float32)

        def beta_step(k, carry):
            h, lp, lq, glp, glq, log_w, packed = carry
            beta = sched[0, k]
            eps = sched[1, k]
            dbeta = sched[2, k]
            omb = 1.0 - beta

            # energy & force at the current h from carried terms (no decoder pass)
            U0 = -(beta * lp + omb * lq)
            g = -(beta * glp + omb * glq)
            mom = mom_ref[k - 1]
            u = unif_ref[k - 1]

            # leapfrog (full kick every step; undo half of the last one)
            q = h
            p = mom - 0.5 * eps * g
            lp_p, lq_p, glp_p, glq_p = lp, lq, glp, glq
            for _ in range(L):
                q = q + eps * p
                lp_p, lq_p, glp_p, glq_p = eval_at(q)
                g = -(beta * glp_p + omb * glq_p)
                p = p - eps * g
            p = p + 0.5 * eps * g

            Uq = -(beta * lp_p + omb * lq_p)
            cur_E = U0 + 0.5 * jnp.sum(mom * mom, axis=-1, keepdims=True)
            prop_E = Uq + 0.5 * jnp.sum(p * p, axis=-1, keepdims=True)
            accept = u <= jnp.exp(-(prop_E - cur_E))

            h = jnp.where(accept, q, h)
            lp = jnp.where(accept, lp_p, lp)
            lq = jnp.where(accept, lq_p, lq)
            glp = jnp.where(accept, glp_p, glp)
            glq = jnp.where(accept, glq_p, glq)

            log_w = log_w + dbeta * (lp - lq)
            packed = packed + accept.astype(jnp.float32) * \
                (lane == k + 1).astype(jnp.float32)
            return (h, lp, lq, glp, glq, log_w, packed)

        carry = (h0, lp0, lq0, glp0, glq0, log_w0, packed0)
        _, lp, _, _, _, log_w, packed = lax.fori_loop(1, Kb, beta_step, carry)

        # lane-dense packed output: [log_w, log P(x, h_final), accept flags, 0...]
        out_ref[...] = (packed
                        + log_w * (lane == 0).astype(jnp.float32)
                        + lp * (lane == 1).astype(jnp.float32))

    return kernel


# ----------------------------------------------------------------------------
# Model wrapper (parameters + AIWAE.forward control flow)
# ----------------------------------------------------------------------------
class AIWAEPallas:
    def __init__(self, input_size, hidden_size, key):
        self.input_size = input_size
        self.hidden_size = hidden_size
        self.d_pad = _round_up(input_size, _LANES)
        self.vmem_limit = _default_vmem_limit()

        D, Dp, H, W = input_size, self.d_pad, hidden_size, _MLP_WIDTH

        def linear(k, fan_in, fan_out):      # torch nn.Linear default init
            kw, kb = jax.random.split(k)
            bound = 1.0 / math.sqrt(fan_in)
            w = jax.random.uniform(kw, (fan_in, fan_out), jnp.float32, -bound, bound)
            b = jax.random.uniform(kb, (1, fan_out), jnp.float32, -bound, bound)
            return w, b

        def pad2(a, rows, cols):
            return jnp.pad(a, ((0, rows - a.shape[0]), (0, cols - a.shape[1])))

        bf = lambda a: a.astype(jnp.bfloat16)

        ks = jax.random.split(key, 7)
        ew1, eb1 = linear(ks[0], D, 200)
        ew2, eb2 = linear(ks[1], 200, 200)
        wmu, bmu = linear(ks[2], 200, H)
        wls, bls = linear(ks[3], 200, H)
        dw1, db1 = linear(ks[4], H, 200)
        dw2, db2 = linear(ks[5], 200, 200)
        dw3, db3 = linear(ks[6], 200, D)

        p = {}
        # encoder: bf16 weights, f32 biases, zero-padded to lane/MXU widths
        p["enc_w1"] = bf(pad2(ew1, Dp, W)); p["enc_b1"] = pad2(eb1, 1, W)
        p["enc_w2"] = bf(pad2(ew2, W, W));  p["enc_b2"] = pad2(eb2, 1, W)
        p["enc_wmu"] = bf(pad2(wmu, W, H)); p["enc_bmu"] = bmu
        p["enc_wls"] = bf(pad2(wls, W, H)); p["enc_bls"] = bls
        # decoder + pre-transposed copies for the analytic backward pass
        w1p, w2p, w3p = pad2(dw1, H, W), pad2(dw2, W, W), pad2(dw3, W, Dp)
        p["dec_w1"] = bf(w1p); p["dec_b1"] = pad2(db1, 1, W)
        p["dec_w2"] = bf(w2p); p["dec_b2"] = pad2(db2, 1, W)
        p["dec_w3"] = bf(w3p); p["dec_b3"] = pad2(db3, 1, Dp)
        p["dec_w1t"] = bf(w1p.T); p["dec_w2t"] = bf(w2p.T); p["dec_w3t"] = bf(w3p.T)
        self.params = p

    def _compiler_params(self):
        return pltpu.CompilerParams(dimension_semantics=("parallel",),
                                    vmem_limit_bytes=self.vmem_limit)

    # ---- encoder forward (mu, log_sigma) + VAE encoder loss, one kernel ----
    def encoder_and_loss(self, x, key):
        B, D = x.shape
        H, Dp = self.hidden_size, self.d_pad
        p = self.params

        xl = jnp.pad(x, ((0, 0), (0, Dp - D)))      # lane padding only
        TM, B_pad = _pick_row_tile(B)
        xp = jnp.pad(xl, ((0, B_pad - B), (0, 0)))
        eps = jax.random.normal(key, (B_pad, H), jnp.float32)

        weights = [p["enc_w1"], p["enc_b1"], p["enc_w2"], p["enc_b2"],
                   p["enc_wmu"], p["enc_bmu"], p["enc_wls"], p["enc_bls"],
                   p["dec_w1"], p["dec_b1"], p["dec_w2"], p["dec_b2"],
                   p["dec_w3"], p["dec_b3"]]

        def row(cols):
            return pl.BlockSpec((TM, cols), lambda i: (i, 0))

        mu, logsig, loss_slab = pl.pallas_call(
            _make_encoder_kernel(H, D, _LANES),
            grid=(B_pad // TM,),
            in_specs=[row(Dp), row(H)] + [_const_spec(w) for w in weights],
            out_specs=(row(H), row(H), row(_LANES)),
            out_shape=(jax.ShapeDtypeStruct((B_pad, H), jnp.float32),
                       jax.ShapeDtypeStruct((B_pad, H), jnp.float32),
                       jax.ShapeDtypeStruct((B_pad, _LANES), jnp.float32)),
            compiler_params=self._compiler_params(),
        )(xp, eps, *weights)
        return xl, mu[:B], logsig[:B], loss_slab[:B, 0]

    # ---- AIWAE.decoder_loss: fused annealed chain ----
    def decoder_loss(self, xl, mu, logsig, num_annealed_samples,
                     epsilons, L, betas, key):
        B, Dp = xl.shape
        H = self.hidden_size
        S = num_annealed_samples
        Kb = len(betas)
        n_hmc = Kb - 1
        assert Kb >= 2 and L >= 1 and n_hmc + 2 <= _LANES
        p = self.params

        # fold the S annealed samples into the row dimension
        N = S * B
        TM, N_pad = _pick_row_tile(N)

        def rep(a):      # (B, C) -> (N_pad, C): replicate across samples + pad
            a = jnp.broadcast_to(a[None], (S, B, a.shape[1])).reshape(N, a.shape[1])
            return jnp.pad(a, ((0, N_pad - N), (0, 0)))

        x_rep, mu_rep, ls_rep = rep(xl), rep(mu), rep(logsig)

        k0, k1, k2 = jax.random.split(key, 3)
        eps0 = jax.random.normal(k0, (N_pad, H), jnp.float32)
        mom = jax.random.normal(k1, (n_hmc, N_pad, H), jnp.float32)
        unif = jax.random.uniform(k2, (n_hmc, N_pad, 1), jnp.float32)
        # TODO(synk): RNG could move in-kernel (pltpu.prng_*) to drop this DMA,
        # at the cost of diverging from the torch-style host RNG stream.

        weights = [p["dec_w1"], p["dec_b1"], p["dec_w2"], p["dec_b2"],
                   p["dec_w3"], p["dec_b3"],
                   p["dec_w1t"], p["dec_w2t"], p["dec_w3t"]]

        def row(cols):
            return pl.BlockSpec((TM, cols), lambda i: (i, 0))

        def per_step(cols):
            return pl.BlockSpec((n_hmc, TM, cols), lambda i: (0, i, 0))

        out = pl.pallas_call(
            _make_chain_kernel(tuple(float(b) for b in betas),
                               tuple(float(e) for e in epsilons),
                               L, H, self.input_size, _LANES),
            grid=(N_pad // TM,),
            in_specs=[row(Dp), row(H), row(H), row(H),
                      per_step(H), per_step(1)]
                     + [_const_spec(w) for w in weights],
            out_specs=row(_LANES),
            out_shape=jax.ShapeDtypeStruct((N_pad, _LANES), jnp.float32),
            scratch_shapes=[pltpu.SMEM((3, Kb), jnp.float32)],
            compiler_params=self._compiler_params(),
        )(x_rep, mu_rep, ls_rep, eps0, mom, unif, *weights)

        out = out[:N].reshape(S, B, _LANES)
        log_w = out[..., 0]                    # (S, B)
        log_Pxh_final = out[..., 1]            # (S, B)
        flags = out[..., 2:2 + n_hmc]          # (S, B, n_hmc)

        log_w = log_w - jnp.max(log_w, axis=0)
        w = jnp.exp(log_w)
        w = w / jnp.sum(w, axis=0)
        loss = -jnp.sum(w * log_Pxh_final, axis=0)
        accept_rate = jnp.concatenate(
            [jnp.ones((1,), jnp.float32),
             jnp.mean(flags.reshape(-1, n_hmc), axis=0)]).reshape(1, -1)
        return loss, accept_rate

    # ---- AIWAE.forward ----
    def forward(self, x, num_annealed_samples, epsilons, L, betas, key):
        kd, ke = jax.random.split(key)
        xl, mu, logsig, enc_loss = self.encoder_and_loss(x, ke)
        dec_loss, accept_rate = self.decoder_loss(
            xl, mu, logsig, num_annealed_samples, epsilons, L, betas, kd)
        return dec_loss, accept_rate, enc_loss


# ----------------------------------------------------------------------------
if __name__ == "__main__":
    input_size = 16        # flattened "image"
    hidden_size = 8
    batch = 4
    num_annealed_samples = 4
    betas = [0.0, 1.0 / 3.0, 2.0 / 3.0, 1.0]
    epsilons = [0.05, 0.05, 0.05, 0.05]
    L = 2

    key = jax.random.PRNGKey(0)
    kx, kfwd = jax.random.split(key)
    # binarized Bernoulli-style inputs (matches the sigmoid/Bernoulli likelihood)
    x = (jax.random.uniform(kx, (batch, input_size)) > 0.5).astype(jnp.float32)

    model = AIWAEPallas(input_size, hidden_size, jax.random.PRNGKey(42))

    dec_loss, accept_rate, enc_loss = model.forward(
        x, num_annealed_samples, epsilons, L, betas, kfwd)
    jax.block_until_ready((dec_loss, accept_rate, enc_loss))

    assert dec_loss.shape == (batch,)
    assert accept_rate.shape == (1, len(betas))
    assert enc_loss.shape == (batch,)
    assert bool(jnp.all(jnp.isfinite(dec_loss)))
    assert bool(jnp.all(jnp.isfinite(accept_rate)))
    assert bool(jnp.all(jnp.isfinite(enc_loss)))
    print("KERNEL_OK")
</pallas_src>

<mosaic_0001>
module attributes {stable_mosaic.version = 11 : i64} {
  func.func @kernel(%arg0: i32, %arg1: memref<8x128xf32, #tpu.memory_space<vmem>>, %arg2: memref<8x8xf32, #tpu.memory_space<vmem>>, %arg3: memref<128x256xbf16, #tpu.memory_space<vmem>>, %arg4: memref<1x256xf32, #tpu.memory_space<vmem>>, %arg5: memref<256x256xbf16, #tpu.memory_space<vmem>>, %arg6: memref<1x256xf32, #tpu.memory_space<vmem>>, %arg7: memref<256x8xbf16, #tpu.memory_space<vmem>>, %arg8: memref<1x8xf32, #tpu.memory_space<vmem>>, %arg9: memref<256x8xbf16, #tpu.memory_space<vmem>>, %arg10: memref<1x8xf32, #tpu.memory_space<vmem>>, %arg11: memref<8x256xbf16, #tpu.memory_space<vmem>>, %arg12: memref<1x256xf32, #tpu.memory_space<vmem>>, %arg13: memref<256x256xbf16, #tpu.memory_space<vmem>>, %arg14: memref<1x256xf32, #tpu.memory_space<vmem>>, %arg15: memref<256x128xbf16, #tpu.memory_space<vmem>>, %arg16: memref<1x128xf32, #tpu.memory_space<vmem>>, %arg17: memref<8x8xf32, #tpu.memory_space<vmem>>, %arg18: memref<8x8xf32, #tpu.memory_space<vmem>>, %arg19: memref<8x128xf32, #tpu.memory_space<vmem>>) attributes {dimension_semantics = [#tpu.dimension_semantics<parallel>], iteration_bounds = array<i64: 1>, scalar_prefetch = 0 : i64, scratch_operands = 0 : i64, tpu.core_type = #tpu.core_type<tc>, window_params = [{transform_indices = @transform_0, window_bounds = array<i64: 8, 128>}, {transform_indices = @transform_1, window_bounds = array<i64: 8, 8>}, {pipeline_mode = #tpu.pipeline_mode<synchronous>, transform_indices = @transform_2, window_bounds = array<i64: 128, 256>}, {pipeline_mode = #tpu.pipeline_mode<synchronous>, transform_indices = @transform_3, window_bounds = array<i64: 1, 256>}, {pipeline_mode = #tpu.pipeline_mode<synchronous>, transform_indices = @transform_4, window_bounds = array<i64: 256, 256>}, {pipeline_mode = #tpu.pipeline_mode<synchronous>, transform_indices = @transform_5, window_bounds = array<i64: 1, 256>}, {pipeline_mode = #tpu.pipeline_mode<synchronous>, transform_indices = @transform_6, window_bounds = array<i64: 256, 8>}, {pipeline_mode = #tpu.pipeline_mode<synchronous>, transform_indices = @transform_7, window_bounds = array<i64: 1, 8>}, {pipeline_mode = #tpu.pipeline_mode<synchronous>, transform_indices = @transform_8, window_bounds = array<i64: 256, 8>}, {pipeline_mode = #tpu.pipeline_mode<synchronous>, transform_indices = @transform_9, window_bounds = array<i64: 1, 8>}, {pipeline_mode = #tpu.pipeline_mode<synchronous>, transform_indices = @transform_10, window_bounds = array<i64: 8, 256>}, {pipeline_mode = #tpu.pipeline_mode<synchronous>, transform_indices = @transform_11, window_bounds = array<i64: 1, 256>}, {pipeline_mode = #tpu.pipeline_mode<synchronous>, transform_indices = @transform_12, window_bounds = array<i64: 256, 256>}, {pipeline_mode = #tpu.pipeline_mode<synchronous>, transform_indices = @transform_13, window_bounds = array<i64: 1, 256>}, {pipeline_mode = #tpu.pipeline_mode<synchronous>, transform_indices = @transform_14, window_bounds = array<i64: 256, 128>}, {pipeline_mode = #tpu.pipeline_mode<synchronous>, transform_indices = @transform_15, window_bounds = array<i64: 1, 128>}, {transform_indices = @transform_16, window_bounds = array<i64: 8, 8>}, {transform_indices = @transform_17, window_bounds = array<i64: 8, 8>}, {transform_indices = @transform_18, window_bounds = array<i64: 8, 128>}]} {
    %c0 = arith.constant 0 : index
    %c0_0 = arith.constant 0 : index
    %0 = vector.load %arg1[%c0, %c0_0] : memref<8x128xf32, #tpu.memory_space<vmem>>, vector<8x128xf32>
    %1 = arith.truncf %0 : vector<8x128xf32> to vector<8x128xbf16>
    %c0_1 = arith.constant 0 : index
    %c0_2 = arith.constant 0 : index
    %2 = vector.load %arg3[%c0_1, %c0_2] : memref<128x256xbf16, #tpu.memory_space<vmem>>, vector<128x256xbf16>
    %cst = arith.constant dense<0.000000e+00> : vector<8x256xf32>
    %3 = tpu.matmul %1, %2, %cst {dimension_numbers = #tpu.dot_dimension_numbers<[1], [0], [0], [1], [0, 0, 1, 1], [], []>} : vector<8x128xbf16>, vector<128x256xbf16>, vector<8x256xf32> -> vector<8x256xf32>
    %c0_3 = arith.constant 0 : index
    %c0_4 = arith.constant 0 : index
    %4 = vector.load %arg4[%c0_3, %c0_4] : memref<1x256xf32, #tpu.memory_space<vmem>>, vector<1x256xf32>
    %5 = vector.broadcast %4 : vector<1x256xf32> to vector<8x256xf32>
    %6 = arith.addf %3, %5 : vector<8x256xf32>
    %7 = math.tanh %6 : vector<8x256xf32>
    %8 = arith.truncf %7 : vector<8x256xf32> to vector<8x256xbf16>
    %c0_5 = arith.constant 0 : index
    %c0_6 = arith.constant 0 : index
    %9 = vector.load %arg5[%c0_5, %c0_6] : memref<256x256xbf16, #tpu.memory_space<vmem>>, vector<256x256xbf16>
    %cst_7 = arith.constant dense<0.000000e+00> : vector<8x256xf32>
    %10 = tpu.matmul %8, %9, %cst_7 {dimension_numbers = #tpu.dot_dimension_numbers<[1], [0], [0], [1], [0, 0, 1, 1], [], []>} : vector<8x256xbf16>, vector<256x256xbf16>, vector<8x256xf32> -> vector<8x256xf32>
    %c0_8 = arith.constant 0 : index
    %c0_9 = arith.constant 0 : index
    %11 = vector.load %arg6[%c0_8, %c0_9] : memref<1x256xf32, #tpu.memory_space<vmem>>, vector<1x256xf32>
    %12 = vector.broadcast %11 : vector<1x256xf32> to vector<8x256xf32>
    %13 = arith.addf %10, %12 : vector<8x256xf32>
    %14 = math.tanh %13 : vector<8x256xf32>
    %15 = arith.truncf %14 : vector<8x256xf32> to vector<8x256xbf16>
    %c0_10 = arith.constant 0 : index
    %c0_11 = arith.constant 0 : index
    %16 = vector.load %arg7[%c0_10, %c0_11] : memref<256x8xbf16, #tpu.memory_space<vmem>>, vector<256x8xbf16>
    %cst_12 = arith.constant dense<0.000000e+00> : vector<8x8xf32>
    %17 = tpu.matmul %15, %16, %cst_12 {dimension_numbers = #tpu.dot_dimension_numbers<[1], [0], [0], [1], [0, 0, 1, 1], [], []>} : vector<8x256xbf16>, vector<256x8xbf16>, vector<8x8xf32> -> vector<8x8xf32>
    %c0_13 = arith.constant 0 : index
    %c0_14 = arith.constant 0 : index
    %18 = vector.load %arg8[%c0_13, %c0_14] : memref<1x8xf32, #tpu.memory_space<vmem>>, vector<1x8xf32>
    %19 = vector.broadcast %18 : vector<1x8xf32> to vector<8x8xf32>
    %20 = arith.addf %17, %19 : vector<8x8xf32>
    %21 = arith.truncf %14 : vector<8x256xf32> to vector<8x256xbf16>
    %c0_15 = arith.constant 0 : index
    %c0_16 = arith.constant 0 : index
    %22 = vector.load %arg9[%c0_15, %c0_16] : memref<256x8xbf16, #tpu.memory_space<vmem>>, vector<256x8xbf16>
    %cst_17 = arith.constant dense<0.000000e+00> : vector<8x8xf32>
    %23 = tpu.matmul %21, %22, %cst_17 {dimension_numbers = #tpu.dot_dimension_numbers<[1], [0], [0], [1], [0, 0, 1, 1], [], []>} : vector<8x256xbf16>, vector<256x8xbf16>, vector<8x8xf32> -> vector<8x8xf32>
    %c0_18 = arith.constant 0 : index
    %c0_19 = arith.constant 0 : index
    %24 = vector.load %arg10[%c0_18, %c0_19] : memref<1x8xf32, #tpu.memory_space<vmem>>, vector<1x8xf32>
    %25 = vector.broadcast %24 : vector<1x8xf32> to vector<8x8xf32>
    %26 = arith.addf %23, %25 : vector<8x8xf32>
    %27 = math.exp %26 : vector<8x8xf32>
    %c0_20 = arith.constant 0 : index
    %c0_21 = arith.constant 0 : index
    %28 = vector.load %arg2[%c0_20, %c0_21] : memref<8x8xf32, #tpu.memory_space<vmem>>, vector<8x8xf32>
    %29 = arith.mulf %27, %28 : vector<8x8xf32>
    %30 = arith.addf %20, %29 : vector<8x8xf32>
    %31 = arith.truncf %30 : vector<8x8xf32> to vector<8x8xbf16>
    %c0_22 = arith.constant 0 : index
    %c0_23 = arith.constant 0 : index
    %32 = vector.load %arg11[%c0_22, %c0_23] : memref<8x256xbf16, #tpu.memory_space<vmem>>, vector<8x256xbf16>
    %cst_24 = arith.constant dense<0.000000e+00> : vector<8x256xf32>
    %33 = tpu.matmul %31, %32, %cst_24 {dimension_numbers = #tpu.dot_dimension_numbers<[1], [0], [0], [1], [0, 0, 1, 1], [], []>} : vector<8x8xbf16>, vector<8x256xbf16>, vector<8x256xf32> -> vector<8x256xf32>
    %c0_25 = arith.constant 0 : index
    %c0_26 = arith.constant 0 : index
    %34 = vector.load %arg12[%c0_25, %c0_26] : memref<1x256xf32, #tpu.memory_space<vmem>>, vector<1x256xf32>
    %35 = vector.broadcast %34 : vector<1x256xf32> to vector<8x256xf32>
    %36 = arith.addf %33, %35 : vector<8x256xf32>
    %37 = math.tanh %36 : vector<8x256xf32>
    %38 = arith.truncf %37 : vector<8x256xf32> to vector<8x256xbf16>
    %c0_27 = arith.constant 0 : index
    %c0_28 = arith.constant 0 : index
    %39 = vector.load %arg13[%c0_27, %c0_28] : memref<256x256xbf16, #tpu.memory_space<vmem>>, vector<256x256xbf16>
    %cst_29 = arith.constant dense<0.000000e+00> : vector<8x256xf32>
    %40 = tpu.matmul %38, %39, %cst_29 {dimension_numbers = #tpu.dot_dimension_numbers<[1], [0], [0], [1], [0, 0, 1, 1], [], []>} : vector<8x256xbf16>, vector<256x256xbf16>, vector<8x256xf32> -> vector<8x256xf32>
    %c0_30 = arith.constant 0 : index
    %c0_31 = arith.constant 0 : index
    %41 = vector.load %arg14[%c0_30, %c0_31] : memref<1x256xf32, #tpu.memory_space<vmem>>, vector<1x256xf32>
    %42 = vector.broadcast %41 : vector<1x256xf32> to vector<8x256xf32>
    %43 = arith.addf %40, %42 : vector<8x256xf32>
    %44 = math.tanh %43 : vector<8x256xf32>
    %45 = arith.truncf %44 : vector<8x256xf32> to vector<8x256xbf16>
    %c0_32 = arith.constant 0 : index
    %c0_33 = arith.constant 0 : index
    %46 = vector.load %arg15[%c0_32, %c0_33] : memref<256x128xbf16, #tpu.memory_space<vmem>>, vector<256x128xbf16>
    %cst_34 = arith.constant dense<0.000000e+00> : vector<8x128xf32>
    %47 = tpu.matmul %45, %46, %cst_34 {dimension_numbers = #tpu.dot_dimension_numbers<[1], [0], [0], [1], [0, 0, 1, 1], [], []>} : vector<8x256xbf16>, vector<256x128xbf16>, vector<8x128xf32> -> vector<8x128xf32>
    %c0_35 = arith.constant 0 : index
    %c0_36 = arith.constant 0 : index
    %48 = vector.load %arg16[%c0_35, %c0_36] : memref<1x128xf32, #tpu.memory_space<vmem>>, vector<1x128xf32>
    %49 = vector.broadcast %48 : vector<1x128xf32> to vector<8x128xf32>
    %50 = arith.addf %47, %49 : vector<8x128xf32>
    %51 = math.absf %50 : vector<8x128xf32>
    %cst_37 = arith.constant 0.000000e+00 : f32
    %52 = vector.broadcast %cst_37 : f32 to vector<8x128xf32>
    %53 = arith.subf %52, %51 : vector<8x128xf32>
    %54 = math.exp %53 : vector<8x128xf32>
    %55 = arith.mulf %0, %50 : vector<8x128xf32>
    %cst_38 = arith.constant 0.000000e+00 : f32
    %56 = vector.broadcast %cst_38 : f32 to vector<8x128xf32>
    %57 = arith.maximumf %50, %56 : vector<8x128xf32>
    %cst_39 = arith.constant 1.000000e+00 : f32
    %58 = vector.broadcast %cst_39 : f32 to vector<8x128xf32>
    %59 = arith.addf %58, %54 : vector<8x128xf32>
    %60 = math.log %59 : vector<8x128xf32>
    %61 = arith.addf %57, %60 : vector<8x128xf32>
    %62 = arith.subf %55, %61 : vector<8x128xf32>
    %63 = tpu.iota {dimensions = array<i32: 1>} : vector<1x128xi32>
    %c16_i32 = arith.constant 16 : i32
    %64 = vector.broadcast %c16_i32 : i32 to vector<1x128xi32>
    %65 = arith.cmpi slt, %63, %64 : vector<1x128xi32>
    %66 = arith.extui %65 : vector<1x128xi1> to vector<1x128xi32>
    %67 = arith.sitofp %66 : vector<1x128xi32> to vector<1x128xf32>
    %68 = vector.broadcast %67 : vector<1x128xf32> to vector<8x128xf32>
    %69 = arith.mulf %62, %68 : vector<8x128xf32>
    %cst_40 = arith.constant dense<0.000000e+00> : vector<8xf32>
    %70 = vector.multi_reduction <add>, %69, %cst_40 [1] : vector<8x128xf32> to vector<8xf32>
    %71 = vector.shape_cast %70 : vector<8xf32> to vector<8x1xf32>
    %72 = arith.mulf %20, %20 : vector<8x8xf32>
    %73 = arith.mulf %27, %27 : vector<8x8xf32>
    %74 = arith.addf %72, %73 : vector<8x8xf32>
    %cst_41 = arith.constant 1.000000e+00 : f32
    %75 = vector.broadcast %cst_41 : f32 to vector<8x8xf32>
    %76 = arith.subf %74, %75 : vector<8x8xf32>
    %cst_42 = arith.constant 2.000000e+00 : f32
    %77 = vector.broadcast %cst_42 : f32 to vector<8x8xf32>
    %78 = arith.mulf %77, %26 : vector<8x8xf32>
    %79 = arith.subf %76, %78 : vector<8x8xf32>
    %cst_43 = arith.constant dense<0.000000e+00> : vector<8xf32>
    %80 = vector.multi_reduction <add>, %79, %cst_43 [1] : vector<8x8xf32> to vector<8xf32>
    %81 = vector.shape_cast %80 : vector<8xf32> to vector<8x1xf32>
    %cst_44 = arith.constant 5.000000e-01 : f32
    %82 = vector.broadcast %cst_44 : f32 to vector<8x1xf32>
    %83 = arith.mulf %82, %81 : vector<8x1xf32>
    %cst_45 = arith.constant 0.000000e+00 : f32
    %84 = vector.broadcast %cst_45 : f32 to vector<8x1xf32>
    %85 = arith.subf %84, %71 : vector<8x1xf32>
    %86 = arith.addf %85, %83 : vector<8x1xf32>
    %c0_46 = arith.constant 0 : index
    %c0_47 = arith.constant 0 : index
    %87 = vector.load %arg17[%c0_46, %c0_47] : memref<8x8xf32, #tpu.memory_space<vmem>>, vector<8x8xf32>
    tpu.vector_store %arg17[%c0_46, %c0_47], %20 {strides = array<i32>} : memref<8x8xf32, #tpu.memory_space<vmem>>, vector<8x8xf32>,
    %c0_48 = arith.constant 0 : index
    %c0_49 = arith.constant 0 : index
    %88 = vector.load %arg18[%c0_48, %c0_49] : memref<8x8xf32, #tpu.memory_space<vmem>>, vector<8x8xf32>
    tpu.vector_store %arg18[%c0_48, %c0_49], %26 {strides = array<i32>} : memref<8x8xf32, #tpu.memory_space<vmem>>, vector<8x8xf32>,
    %89 = vector.shape_cast %86 : vector<8x1xf32> to vector<8x1xf32>
    %90 = vector.broadcast %89 : vector<8x1xf32> to vector<8x128xf32>
    %c0_50 = arith.constant 0 : index
    %c0_51 = arith.constant 0 : index
    %91 = vector.load %arg19[%c0_50, %c0_51] : memref<8x128xf32, #tpu.memory_space<vmem>>, vector<8x128xf32>
    tpu.vector_store %arg19[%c0_50, %c0_51], %90 {strides = array<i32>} : memref<8x128xf32, #tpu.memory_space<vmem>>, vector<8x128xf32>,
    return
  }
  func.func @transform_0(%arg0: i32) -> (i32, i32) {
    %c0_i32 = arith.constant 0 : i32
    %c0_i32_0 = arith.constant 0 : i32
    return %arg0, %c0_i32 : i32, i32
  }
  func.func @transform_1(%arg0: i32) -> (i32, i32) {
    %c0_i32 = arith.constant 0 : i32
    %c0_i32_0 = arith.constant 0 : i32
    return %arg0, %c0_i32 : i32, i32
  }
  func.func @transform_2(%arg0: i32) -> (i32, i32) {
    %c0_i32 = arith.constant 0 : i32
    %c0_i32_0 = arith.constant 0 : i32
    %c0_i32_1 = arith.constant 0 : i32
    return %c0_i32, %c0_i32_0 : i32, i32
  }
  func.func @transform_3(%arg0: i32) -> (i32, i32) {
    %c0_i32 = arith.constant 0 : i32
    %c0_i32_0 = arith.constant 0 : i32
    %c0_i32_1 = arith.constant 0 : i32
    return %c0_i32, %c0_i32_0 : i32, i32
  }
  func.func @transform_4(%arg0: i32) -> (i32, i32) {
    %c0_i32 = arith.constant 0 : i32
    %c0_i32_0 = arith.constant 0 : i32
    %c0_i32_1 = arith.constant 0 : i32
    return %c0_i32, %c0_i32_0 : i32, i32
  }
  func.func @transform_5(%arg0: i32) -> (i32, i32) {
    %c0_i32 = arith.constant 0 : i32
    %c0_i32_0 = arith.constant 0 : i32
    %c0_i32_1 = arith.constant 0 : i32
    return %c0_i32, %c0_i32_0 : i32, i32
  }
  func.func @transform_6(%arg0: i32) -> (i32, i32) {
    %c0_i32 = arith.constant 0 : i32
    %c0_i32_0 = arith.constant 0 : i32
    %c0_i32_1 = arith.constant 0 : i32
    return %c0_i32, %c0_i32_0 : i32, i32
  }
  func.func @transform_7(%arg0: i32) -> (i32, i32) {
    %c0_i32 = arith.constant 0 : i32
    %c0_i32_0 = arith.constant 0 : i32
    %c0_i32_1 = arith.constant 0 : i32
    return %c0_i32, %c0_i32_0 : i32, i32
  }
  func.func @transform_8(%arg0: i32) -> (i32, i32) {
    %c0_i32 = arith.constant 0 : i32
    %c0_i32_0 = arith.constant 0 : i32
    %c0_i32_1 = arith.constant 0 : i32
    return %c0_i32, %c0_i32_0 : i32, i32
  }
  func.func @transform_9(%arg0: i32) -> (i32, i32) {
    %c0_i32 = arith.constant 0 : i32
    %c0_i32_0 = arith.constant 0 : i32
    %c0_i32_1 = arith.constant 0 : i32
    return %c0_i32, %c0_i32_0 : i32, i32
  }
  func.func @transform_10(%arg0: i32) -> (i32, i32) {
    %c0_i32 = arith.constant 0 : i32
    %c0_i32_0 = arith.constant 0 : i32
    %c0_i32_1 = arith.constant 0 : i32
    return %c0_i32, %c0_i32_0 : i32, i32
  }
  func.func @transform_11(%arg0: i32) -> (i32, i32) {
    %c0_i32 = arith.constant 0 : i32
    %c0_i32_0 = arith.constant 0 : i32
    %c0_i32_1 = arith.constant 0 : i32
    return %c0_i32, %c0_i32_0 : i32, i32
  }
  func.func @transform_12(%arg0: i32) -> (i32, i32) {
    %c0_i32 = arith.constant 0 : i32
    %c0_i32_0 = arith.constant 0 : i32
    %c0_i32_1 = arith.constant 0 : i32
    return %c0_i32, %c0_i32_0 : i32, i32
  }
  func.func @transform_13(%arg0: i32) -> (i32, i32) {
    %c0_i32 = arith.constant 0 : i32
    %c0_i32_0 = arith.constant 0 : i32
    %c0_i32_1 = arith.constant 0 : i32
    return %c0_i32, %c0_i32_0 : i32, i32
  }
  func.func @transform_14(%arg0: i32) -> (i32, i32) {
    %c0_i32 = arith.constant 0 : i32
    %c0_i32_0 = arith.constant 0 : i32
    %c0_i32_1 = arith.constant 0 : i32
    return %c0_i32, %c0_i32_0 : i32, i32
  }
  func.func @transform_15(%arg0: i32) -> (i32, i32) {
    %c0_i32 = arith.constant 0 : i32
    %c0_i32_0 = arith.constant 0 : i32
    %c0_i32_1 = arith.constant 0 : i32
    return %c0_i32, %c0_i32_0 : i32, i32
  }
  func.func @transform_16(%arg0: i32) -> (i32, i32) {
    %c0_i32 = arith.constant 0 : i32
    %c0_i32_0 = arith.constant 0 : i32
    return %arg0, %c0_i32 : i32, i32
  }
  func.func @transform_17(%arg0: i32) -> (i32, i32) {
    %c0_i32 = arith.constant 0 : i32
    %c0_i32_0 = arith.constant 0 : i32
    return %arg0, %c0_i32 : i32, i32
  }
  func.func @transform_18(%arg0: i32) -> (i32, i32) {
    %c0_i32 = arith.constant 0 : i32
    %c0_i32_0 = arith.constant 0 : i32
    return %arg0, %c0_i32 : i32, i32
  }
}

</mosaic_0001>

<llo_original>
// kernel: tpu_custom_call.1
$region0: #{tpu_custom_call.1}
  #allocation0 [shape = 'u32[]', space=smem, size = 0x4, offset = 0x4, fixed_abs, tag = 'smem constant byte address 0x4 - core index']
  #allocation1 [shape = 'u32[72,128]{1,0:T(1,128)}', space=vmem, size = 0x9000, scoped, tag = 'internal scratch']
  %s0 = inlined_call_operand.vmem [shape: f32[8,128], index: 0, kind: input, shape index: {}]
  %s1 = inlined_call_operand.hbm [shape: f32[8,8], index: 1, kind: input, shape index: {}]
  %s2 = inlined_call_operand.hbm [shape: bf16[128,256], index: 2, kind: input, shape index: {}]
  %s3 = inlined_call_operand.hbm [shape: f32[1,256], index: 3, kind: input, shape index: {}]
  %s4 = inlined_call_operand.vmem [shape: bf16[256,256], index: 4, kind: input, shape index: {}]
  %s5 = inlined_call_operand.hbm [shape: f32[1,256], index: 5, kind: input, shape index: {}]
  %s6 = inlined_call_operand.vmem [shape: bf16[256,8], index: 6, kind: input, shape index: {}]
  %s7 = inlined_call_operand.hbm [shape: f32[1,8], index: 7, kind: input, shape index: {}]
  %s8 = inlined_call_operand.vmem [shape: bf16[256,8], index: 8, kind: input, shape index: {}]
  %s9 = inlined_call_operand.hbm [shape: f32[1,8], index: 9, kind: input, shape index: {}]
  %s10 = inlined_call_operand.vmem [shape: bf16[8,256], index: 10, kind: input, shape index: {}]
  %s11 = inlined_call_operand.hbm [shape: f32[1,256], index: 11, kind: input, shape index: {}]
  %s12 = inlined_call_operand.hbm [shape: bf16[256,256], index: 12, kind: input, shape index: {}]
  %s13 = inlined_call_operand.vmem [shape: f32[1,256], index: 13, kind: input, shape index: {}]
  %s14 = inlined_call_operand.hbm [shape: bf16[256,128], index: 14, kind: input, shape index: {}]
  %s15 = inlined_call_operand.vmem [shape: f32[1,128], index: 15, kind: input, shape index: {}]
  %s16 = inlined_call_operand.hbm [shape: f32[8,8], index: 16, kind: output, shape index: {0}]
  %s17 = inlined_call_operand.hbm [shape: f32[8,8], index: 17, kind: output, shape index: {1}]
  %s18 = inlined_call_operand.hbm [shape: f32[8,128], index: 18, kind: output, shape index: {2}]
  %19 = xla_tuple %s16, %s17, %s18
  %s20 = sld [smem:[#allocation0]]
  $region126: #{tpu_custom_call.1} parent=0
    _
  %s22 = ssub.s32 1, %s20
  %s23 = scalar_select 0, %s22, %s20
  $region1: #{tpu_custom_call.1} parent=0
    #allocation2 [shape = 'u8[4096]{0}', space=vmem, size = 0x1000, scoped, tag = 'input window, operand 1, single buffered']
    #allocation3 [shape = 's32[1]{0}', space=sflag, size = 0x4, scoped, tag = 'scoped memory for tpu_custom_call.1']
    #allocation4 [shape = 's32[1]{0}', space=sflag, size = 0x4, scoped, tag = 'scoped memory for tpu_custom_call.1']
    #allocation5 [shape = 'u8[65536]{0}', space=vmem, size = 0x10000, scoped, tag = 'input window, operand 2, single buffered']
    #allocation6 [shape = 's32[1]{0}', space=sflag, size = 0x4, scoped, tag = 'scoped memory for tpu_custom_call.1']
    #allocation7 [shape = 'u8[1024]{0}', space=vmem, size = 0x400, scoped, tag = 'input window, operand 3, single buffered']
    #allocation8 [shape = 'u8[1024]{0}', space=vmem, size = 0x400, scoped, tag = 'input window, operand 5, single buffered']
    #allocation9 [shape = 's32[1]{0}', space=sflag, size = 0x4, scoped, tag = 'scoped memory for tpu_custom_call.1']
    #allocation10 [shape = 'u8[512]{0}', space=vmem, size = 0x400, scoped, tag = 'input window, operand 7, single buffered']
    #allocation11 [shape = 'u8[512]{0}', space=vmem, size = 0x400, scoped, tag = 'input window, operand 9, single buffered']
    #allocation12 [shape = 's32[1]{0}', space=sflag, size = 0x4, scoped, tag = 'scoped memory for tpu_custom_call.1']
    #allocation13 [shape = 'u8[1024]{0}', space=vmem, size = 0x400, scoped, tag = 'input window, operand 11, single buffered']
    #allocation14 [shape = 'u8[131072]{0}', space=vmem, size = 0x20000, scoped, tag = 'input window, operand 12, single buffered']
    #allocation15 [shape = 's32[1]{0}', space=sflag, size = 0x4, scoped, tag = 'scoped memory for tpu_custom_call.1']
    #allocation16 [shape = 'u8[65536]{0}', space=vmem, size = 0x10000, scoped, tag = 'input window, operand 14, single buffered']
    #allocation17 [shape = 'u8[4096]{0}', space=vmem, size = 0x1000, scoped, tag = 'output window, operand 0, single buffered']
    #allocation18 [shape = 'u8[4096]{0}', space=vmem, size = 0x1000, scoped, tag = 'output window, operand 1, single buffered']
    #allocation19 [shape = 's32[1]{0}', space=sflag, size = 0x4, scoped, tag = 'scoped memory for tpu_custom_call.1']
    #allocation20 [shape = 'u8[4096]{0}', space=vmem, size = 0x1000, scoped, tag = 'output window, operand 2, single buffered']
    %24 = vsyncpa [#allocation3], 0
    %25 = vsyncpa [#allocation6], 0
    %26 = vsyncpa [#allocation9], 0
    %27 = vsyncpa [#allocation12], 0
    %28 = vsyncpa [#allocation15], 0
    %29 = vsyncpa [#allocation4], 0
    %30 = vsyncpa [#allocation19], 0
    // Predicated region
    $region2: #{tpu_custom_call.1} parent=1 // pred_check
      _
    $region3: #{tpu_custom_call.1} parent=1 // pred_check_branch
      %32 = sbr.rel (0) target = $region5
    $region4: #{tpu_custom_call.1} parent=1 // pred_region
      _
    $region5: #{tpu_custom_call.1} parent=1 // pred_fallthru
      _
    // Predicated region
    $region6: #{tpu_custom_call.1} parent=1 // pred_check
      _
    $region7: #{tpu_custom_call.1} parent=1 // pred_check_branch
      %34 = sbr.rel (0) target = $region9
    $region8: #{tpu_custom_call.1} parent=1 // pred_region
      %36 = vsyncadd [#allocation3], 0
      %s38 = sshll.u32 %s1, 4
      %s39 = int_to_ptr.hbm [resolvable:$true] %s38
      %s40 = sshll.u32 [#allocation2], 4
      %s41 = int_to_ptr.vmem [resolvable:$true] %s40
      %43 = dma.hbm_to_vmem [thread:$0]  %s39, 128, %s41, [#allocation3]
    $region9: #{tpu_custom_call.1} parent=1 // pred_fallthru
      _
    // Predicated region
    $region10: #{tpu_custom_call.1} parent=1 // pred_check
      _
    $region11: #{tpu_custom_call.1} parent=1 // pred_check_branch
      %45 = sbr.rel (0) target = $region13
    $region12: #{tpu_custom_call.1} parent=1 // pred_region
      %47 = vsyncadd [#allocation6], 0
      %s48 = sshll.u32 %s2, 4
      %s49 = int_to_ptr.hbm [resolvable:$true] %s48
      %s50 = sshll.u32 [#allocation5], 4
      %s51 = int_to_ptr.vmem [resolvable:$true] %s50
      %56 = dma.hbm_to_vmem [thread:$0]  %s49, 2048, %s51, [#allocation6], 128, 128, 8
    $region13: #{tpu_custom_call.1} parent=1 // pred_fallthru
      _
    // Predicated region
    $region14: #{tpu_custom_call.1} parent=1 // pred_check
      _
    $region15: #{tpu_custom_call.1} parent=1 // pred_check_branch
      %58 = sbr.rel (0) target = $region17
    $region16: #{tpu_custom_call.1} parent=1 // pred_region
      %60 = vsyncadd [#allocation6], 0
      %s62 = sshll.u32 %s3, 4
      %s63 = int_to_ptr.hbm [resolvable:$true] %s62
      %s64 = sshll.u32 [#allocation7], 4
      %s65 = int_to_ptr.vmem [resolvable:$true] %s64
      %67 = dma.hbm_to_vmem [thread:$0]  %s63, 32, %s65, [#allocation6]
    $region17: #{tpu_custom_call.1} parent=1 // pred_fallthru
      _
    // Predicated region
    $region18: #{tpu_custom_call.1} parent=1 // pred_check
      _
    $region19: #{tpu_custom_call.1} parent=1 // pred_check_branch
      %69 = sbr.rel (0) target = $region21
    $region20: #{tpu_custom_call.1} parent=1 // pred_region
      _
    $region21: #{tpu_custom_call.1} parent=1 // pred_fallthru
      _
    // Predicated region
    $region22: #{tpu_custom_call.1} parent=1 // pred_check
      _
    $region23: #{tpu_custom_call.1} parent=1 // pred_check_branch
      %71 = sbr.rel (0) target = $region25
    $region24: #{tpu_custom_call.1} parent=1 // pred_region
      %73 = vsyncadd [#allocation9], 0
      %s75 = sshll.u32 %s5, 4
      %s76 = int_to_ptr.hbm [resolvable:$true] %s75
      %s77 = sshll.u32 [#allocation8], 4
      %s78 = int_to_ptr.vmem [resolvable:$true] %s77
      %80 = dma.hbm_to_vmem [thread:$0]  %s76, 32, %s78, [#allocation9]
    $region25: #{tpu_custom_call.1} parent=1 // pred_fallthru
      _
    // Predicated region
    $region26: #{tpu_custom_call.1} parent=1 // pred_check
      _
    $region27: #{tpu_custom_call.1} parent=1 // pred_check_branch
      %82 = sbr.rel (0) target = $region29
    $region28: #{tpu_custom_call.1} parent=1 // pred_region
      _
    $region29: #{tpu_custom_call.1} parent=1 // pred_fallthru
      _
    // Predicated region
    $region30: #{tpu_custom_call.1} parent=1 // pred_check
      _
    $region31: #{tpu_custom_call.1} parent=1 // pred_check_branch
      %84 = sbr.rel (0) target = $region33
    $region32: #{tpu_custom_call.1} parent=1 // pred_region
      %86 = vsyncadd [#allocation9], 0
      %s88 = sshll.u32 %s7, 4
      %s89 = int_to_ptr.hbm [resolvable:$true] %s88
      %s90 = sshll.u32 [#allocation10], 4
      %s91 = int_to_ptr.vmem [resolvable:$true] %s90
      %93 = dma.hbm_to_vmem [thread:$0]  %s89, 16, %s91, [#allocation9]
    $region33: #{tpu_custom_call.1} parent=1 // pred_fallthru
      _
    // Predicated region
    $region34: #{tpu_custom_call.1} parent=1 // pred_check
      _
    $region35: #{tpu_custom_call.1} parent=1 // pred_check_branch
      %95 = sbr.rel (0) target = $region37
    $region36: #{tpu_custom_call.1} parent=1 // pred_region
      _
    $region37: #{tpu_custom_call.1} parent=1 // pred_fallthru
      _
    // Predicated region
    $region38: #{tpu_custom_call.1} parent=1 // pred_check
      _
    $region39: #{tpu_custom_call.1} parent=1 // pred_check_branch
      %97 = sbr.rel (0) target = $region41
    $region40: #{tpu_custom_call.1} parent=1 // pred_region
      %99 = vsyncadd [#allocation12], 0
      %s101 = sshll.u32 %s9, 4
      %s102 = int_to_ptr.hbm [resolvable:$true] %s101
      %s103 = sshll.u32 [#allocation11], 4
      %s104 = int_to_ptr.vmem [resolvable:$true] %s103
      %106 = dma.hbm_to_vmem [thread:$0]  %s102, 16, %s104, [#allocation12]
    $region41: #{tpu_custom_call.1} parent=1 // pred_fallthru
      _
    // Predicated region
    $region42: #{tpu_custom_call.1} parent=1 // pred_check
      _
    $region43: #{tpu_custom_call.1} parent=1 // pred_check_branch
      %108 = sbr.rel (0) target = $region45
    $region44: #{tpu_custom_call.1} parent=1 // pred_region
      _
    $region45: #{tpu_custom_call.1} parent=1 // pred_fallthru
      _
    // Predicated region
    $region46: #{tpu_custom_call.1} parent=1 // pred_check
      _
    $region47: #{tpu_custom_call.1} parent=1 // pred_check_branch
      %110 = sbr.rel (0) target = $region49
    $region48: #{tpu_custom_call.1} parent=1 // pred_region
      %112 = vsyncadd [#allocation12], 0
      %s114 = sshll.u32 %s11, 4
      %s115 = int_to_ptr.hbm [resolvable:$true] %s114
      %s116 = sshll.u32 [#allocation13], 4
      %s117 = int_to_ptr.vmem [resolvable:$true] %s116
      %119 = dma.hbm_to_vmem [thread:$0]  %s115, 32, %s117, [#allocation12]
    $region49: #{tpu_custom_call.1} parent=1 // pred_fallthru
      _
    // Predicated region
    $region50: #{tpu_custom_call.1} parent=1 // pred_check
      _
    $region51: #{tpu_custom_call.1} parent=1 // pred_check_branch
      %121 = sbr.rel (0) target = $region53
    $region52: #{tpu_custom_call.1} parent=1 // pred_region
      %123 = vsyncadd [#allocation15], 0
      %s124 = sshll.u32 %s12, 4
      %s125 = int_to_ptr.hbm [resolvable:$true] %s124
      %s126 = sshll.u32 [#allocation14], 4
      %s127 = int_to_ptr.vmem [resolvable:$true] %s126
      %132 = dma.hbm_to_vmem [thread:$0]  %s125, 4096, %s127, [#allocation15], 128, 128, 8
    $region53: #{tpu_custom_call.1} parent=1 // pred_fallthru
      _
    // Predicated region
    $region54: #{tpu_custom_call.1} parent=1 // pred_check
      _
    $region55: #{tpu_custom_call.1} parent=1 // pred_check_branch
      %134 = sbr.rel (0) target = $region57
    $region56: #{tpu_custom_call.1} parent=1 // pred_region
      _
    $region57: #{tpu_custom_call.1} parent=1 // pred_fallthru
      _
    // Predicated region
    $region58: #{tpu_custom_call.1} parent=1 // pred_check
      _
    $region59: #{tpu_custom_call.1} parent=1 // pred_check_branch
      %136 = sbr.rel (0) target = $region61
    $region60: #{tpu_custom_call.1} parent=1 // pred_region
      %138 = vsyncadd [#allocation15], 0
      %s139 = sshll.u32 %s14, 4
      %s140 = int_to_ptr.hbm [resolvable:$true] %s139
      %s141 = sshll.u32 [#allocation16], 4
      %s142 = int_to_ptr.vmem [resolvable:$true] %s141
      %147 = dma.hbm_to_vmem [thread:$0]  %s140, 2048, %s142, [#allocation15], 64, 64, 4
    $region61: #{tpu_custom_call.1} parent=1 // pred_fallthru
      _
    // Predicated region
    $region62: #{tpu_custom_call.1} parent=1 // pred_check
      _
    $region63: #{tpu_custom_call.1} parent=1 // pred_check_branch
      %149 = sbr.rel (0) target = $region65
    $region64: #{tpu_custom_call.1} parent=1 // pred_region
      _
    $region65: #{tpu_custom_call.1} parent=1 // pred_fallthru
      _
    // Predicated region
    $region66: #{tpu_custom_call.1} parent=1 // pred_check
      _
    $region67: #{tpu_custom_call.1} parent=1 // pred_check_branch
      %151 = sbr.rel (0) target = $region69
    $region68: #{tpu_custom_call.1} parent=1 // pred_region
      %153 = dma.done [#allocation3], 128
    $region69: #{tpu_custom_call.1} parent=1 // pred_fallthru
      _
    // Predicated region
    $region70: #{tpu_custom_call.1} parent=1 // pred_check
      _
    $region71: #{tpu_custom_call.1} parent=1 // pred_check_branch
      %155 = sbr.rel (0) target = $region73
    $region72: #{tpu_custom_call.1} parent=1 // pred_region
      %157 = dma.done [#allocation6], 2048
    $region73: #{tpu_custom_call.1} parent=1 // pred_fallthru
      _
    // Predicated region
    $region74: #{tpu_custom_call.1} parent=1 // pred_check
      _
    $region75: #{tpu_custom_call.1} parent=1 // pred_check_branch
      %159 = sbr.rel (0) target = $region77
    $region76: #{tpu_custom_call.1} parent=1 // pred_region
      %161 = dma.done [#allocation6], 32
    $region77: #{tpu_custom_call.1} parent=1 // pred_fallthru
      _
    // Predicated region
    $region78: #{tpu_custom_call.1} parent=1 // pred_check
      _
    $region79: #{tpu_custom_call.1} parent=1 // pred_check_branch
      %163 = sbr.rel (0) target = $region81
    $region80: #{tpu_custom_call.1} parent=1 // pred_region
      %165 = dma.done [#allocation9], 32
    $region81: #{tpu_custom_call.1} parent=1 // pred_fallthru
      _
    // Predicated region
    $region82: #{tpu_custom_call.1} parent=1 // pred_check
      _
    $region83: #{tpu_custom_call.1} parent=1 // pred_check_branch
      %167 = sbr.rel (0) target = $region85
    $region84: #{tpu_custom_call.1} parent=1 // pred_region
      %169 = dma.done [#allocation9], 16
    $region85: #{tpu_custom_call.1} parent=1 // pred_fallthru
      _
    // Predicated region
    $region86: #{tpu_custom_call.1} parent=1 // pred_check
      _
    $region87: #{tpu_custom_call.1} parent=1 // pred_check_branch
      %171 = sbr.rel (0) target = $region89
    $region88: #{tpu_custom_call.1} parent=1 // pred_region
      %173 = dma.done [#allocation12], 16
    $region89: #{tpu_custom_call.1} parent=1 // pred_fallthru
      _
    // Predicated region
    $region90: #{tpu_custom_call.1} parent=1 // pred_check
      _
    $region91: #{tpu_custom_call.1} parent=1 // pred_check_branch
      %175 = sbr.rel (0) target = $region93
    $region92: #{tpu_custom_call.1} parent=1 // pred_region
      %177 = dma.done [#allocation12], 32
    $region93: #{tpu_custom_call.1} parent=1 // pred_fallthru
      _
    // Predicated region
    $region94: #{tpu_custom_call.1} parent=1 // pred_check
      _
    $region95: #{tpu_custom_call.1} parent=1 // pred_check_branch
      %179 = sbr.rel (0) target = $region97
    $region96: #{tpu_custom_call.1} parent=1 // pred_region
      %181 = dma.done [#allocation15], 4096
    $region97: #{tpu_custom_call.1} parent=1 // pred_fallthru
      _
    // Predicated region
    $region98: #{tpu_custom_call.1} parent=1 // pred_check
      _
    $region99: #{tpu_custom_call.1} parent=1 // pred_check_branch
      %183 = sbr.rel (0) target = $region101
    $region100: #{tpu_custom_call.1} parent=1 // pred_region
      %185 = dma.done [#allocation15], 2048
    $region101: #{tpu_custom_call.1} parent=1 // pred_fallthru
      _
    %v187 = vld [vmem:[%s0] sm:$0xff]
    %v188 = vpack.c.bf16 %v187, %v187
    %v189 = vld [vmem:[#allocation5] sm:$0xff]
    %v190 = vld [vmem:[#allocation5 + $0x8] sm:$0xff]
    %v191 = vld [vmem:[#allocation5 + $0x10] sm:$0xff]
    %v192 = vld [vmem:[#allocation5 + $0x18] sm:$0xff]
    %v193 = vld [vmem:[#allocation5 + $0x20] sm:$0xff]
    %v194 = vld [vmem:[#allocation5 + $0x28] sm:$0xff]
    %v195 = vld [vmem:[#allocation5 + $0x30] sm:$0xff]
    %v196 = vld [vmem:[#allocation5 + $0x38] sm:$0xff]
    %v197 = vld [vmem:[#allocation5 + $0x40] sm:$0xff]
    %v198 = vld [vmem:[#allocation5 + $0x48] sm:$0xff]
    %v199 = vld [vmem:[#allocation5 + $0x50] sm:$0xff]
    %v200 = vld [vmem:[#allocation5 + $0x58] sm:$0xff]
    %v201 = vld [vmem:[#allocation5 + $0x60] sm:$0xff]
    %v202 = vld [vmem:[#allocation5 + $0x68] sm:$0xff]
    %v203 = vld [vmem:[#allocation5 + $0x70] sm:$0xff]
    %v204 = vld [vmem:[#allocation5 + $0x78] sm:$0xff]
    %v205 = vld [vmem:[#allocation7] sm:$0x3]
    %v207 = vperm.slane %v205, 0
    %v208 = vperm.slane %v205, 1
    %v227 = vunpack.c.l.b16 %v189
    %v228 = vunpack.c.h.b16 %v189
    %v229 = vunpack.c.l.b16 %v190
    %v230 = vunpack.c.h.b16 %v190
    %v231 = vunpack.c.l.b16 %v191
    %v232 = vunpack.c.h.b16 %v191
    %v233 = vunpack.c.l.b16 %v192
    %v234 = vunpack.c.h.b16 %v192
    %v235 = vunpack.c.l.b16 %v193
    %v236 = vunpack.c.h.b16 %v193
    %v237 = vunpack.c.l.b16 %v194
    %v238 = vunpack.c.h.b16 %v194
    %v239 = vunpack.c.l.b16 %v195
    %v240 = vunpack.c.h.b16 %v195
    %v241 = vunpack.c.l.b16 %v196
    %v242 = vunpack.c.h.b16 %v196
    %v243 = vunpack.c.l.b16 %v197
    %v244 = vunpack.c.h.b16 %v197
    %v245 = vunpack.c.l.b16 %v198
    %v246 = vunpack.c.h.b16 %v198
    %v247 = vunpack.c.l.b16 %v199
    %v248 = vunpack.c.h.b16 %v199
    %v249 = vunpack.c.l.b16 %v200
    %v250 = vunpack.c.h.b16 %v200
    %v251 = vunpack.c.l.b16 %v201
    %v252 = vunpack.c.h.b16 %v201
    %v253 = vunpack.c.l.b16 %v202
    %v254 = vunpack.c.h.b16 %v202
    %v255 = vunpack.c.l.b16 %v203
    %v256 = vunpack.c.h.b16 %v203
    %v257 = vunpack.c.l.b16 %v204
    %v258 = vunpack.c.h.b16 %v204
    %v259 = vpack.c.b16 %v229, %v227
    %v260 = vpack.c.b16 %v230, %v228
    %v261 = vpack.c.b16 %v233, %v231
    %v262 = vpack.c.b16 %v234, %v232
    %v263 = vpack.c.b16 %v237, %v235
    %v264 = vpack.c.b16 %v238, %v236
    %v265 = vpack.c.b16 %v241, %v239
    %v266 = vpack.c.b16 %v242, %v240
    %v267 = vpack.c.b16 %v245, %v243
    %v268 = vpack.c.b16 %v246, %v244
    %v269 = vpack.c.b16 %v249, %v247
    %v270 = vpack.c.b16 %v250, %v248
    %v271 = vpack.c.b16 %v253, %v251
    %v272 = vpack.c.b16 %v254, %v252
    %v273 = vpack.c.b16 %v257, %v255
    %v274 = vpack.c.b16 %v258, %v256
    %291 = vmatpush.bf16.msra.mxu0 %v273
    %292 = vmatpush.bf16.msra.mxu0 %v271
    %293 = vmatpush.bf16.msra.mxu0 %v269
    %294 = vmatpush.bf16.msra.mxu0 %v267
    %295 = vmatpush.bf16.msra.mxu0 %v265
    %296 = vmatpush.bf16.msra.mxu0 %v263
    %297 = vmatpush.bf16.msra.mxu0 %v261
    %298 = vmatpush.bf16.msra.mxu0 %v259
    %299 = vmatmul.bf16.gmra.mxu0 %v188
    %v300 = vpop.f32.mrf.mxu0
    %v301 = vadd.f32 %v207, %v300
    %v302 = vpop.f32.mrf.mxu0
    %303 = vdwg.mxu0
    %304 = vmatpush.bf16.msra.mxu0 %v274
    %305 = vmatpush.bf16.msra.mxu0 %v272
    %306 = vmatpush.bf16.msra.mxu0 %v270
    %307 = vmatpush.bf16.msra.mxu0 %v268
    %308 = vmatpush.bf16.msra.mxu0 %v266
    %309 = vmatpush.bf16.msra.mxu0 %v264
    %310 = vmatpush.bf16.msra.mxu0 %v262
    %311 = vmatpush.bf16.msra.mxu0 %v260
    %312 = vmatmul.bf16.gmra.mxu0 %v188
    %v313 = vpop.f32.mrf.mxu0
    %v314 = vadd.f32 %v208, %v313
    %v315 = vpop.f32.mrf.mxu0
    %316 = vdwg.mxu0
    %v317 = vtanh.pop %v301
    %v318 = vtanh.pop %v314
    %v319 = vpack.c.bf16 %v317, %v317
    %v320 = vpack.c.bf16 %v318, %v318
    %v321 = vld [vmem:[%s4] sm:$0xff]
    %v322 = vld [vmem:[%s4 + $0x8] sm:$0xff]
    %v323 = vld [vmem:[%s4 + $0x10] sm:$0xff]
    %v324 = vld [vmem:[%s4 + $0x18] sm:$0xff]
    %v325 = vld [vmem:[%s4 + $0x20] sm:$0xff]
    %v326 = vld [vmem:[%s4 + $0x28] sm:$0xff]
    %v327 = vld [vmem:[%s4 + $0x30] sm:$0xff]
    %v328 = vld [vmem:[%s4 + $0x38] sm:$0xff]
    %v329 = vld [vmem:[%s4 + $0x40] sm:$0xff]
    %v330 = vld [vmem:[%s4 + $0x48] sm:$0xff]
    %v331 = vld [vmem:[%s4 + $0x50] sm:$0xff]
    %v332 = vld [vmem:[%s4 + $0x58] sm:$0xff]
    %v333 = vld [vmem:[%s4 + $0x60] sm:$0xff]
    %v334 = vld [vmem:[%s4 + $0x68] sm:$0xff]
    %v335 = vld [vmem:[%s4 + $0x70] sm:$0xff]
    %v336 = vld [vmem:[%s4 + $0x78] sm:$0xff]
    %v337 = vld [vmem:[%s4 + $0x80] sm:$0xff]
    %v338 = vld [vmem:[%s4 + $0x88] sm:$0xff]
    %v339 = vld [vmem:[%s4 + $0x90] sm:$0xff]
    %v340 = vld [vmem:[%s4 + $0x98] sm:$0xff]
    %v341 = vld [vmem:[%s4 + $0xa0] sm:$0xff]
    %v342 = vld [vmem:[%s4 + $0xa8] sm:$0xff]
    %v343 = vld [vmem:[%s4 + $0xb0] sm:$0xff]
    %v344 = vld [vmem:[%s4 + $0xb8] sm:$0xff]
    %v345 = vld [vmem:[%s4 + $0xc0] sm:$0xff]
    %v346 = vld [vmem:[%s4 + $0xc8] sm:$0xff]
    %v347 = vld [vmem:[%s4 + $0xd0] sm:$0xff]
    %v348 = vld [vmem:[%s4 + $0xd8] sm:$0xff]
    %v349 = vld [vmem:[%s4 + $0xe0] sm:$0xff]
    %v350 = vld [vmem:[%s4 + $0xe8] sm:$0xff]
    %v351 = vld [vmem:[%s4 + $0xf0] sm:$0xff]
    %v352 = vld [vmem:[%s4 + $0xf8] sm:$0xff]
    %v353 = vld [vmem:[#allocation8] sm:$0x3]
    %v355 = vperm.slane %v353, 0
    %v356 = vperm.slane %v353, 1
    %v391 = vunpack.c.l.b16 %v321
    %v392 = vunpack.c.h.b16 %v321
    %v393 = vunpack.c.l.b16 %v322
    %v394 = vunpack.c.h.b16 %v322
    %v395 = vunpack.c.l.b16 %v323
    %v396 = vunpack.c.h.b16 %v323
    %v397 = vunpack.c.l.b16 %v324
    %v398 = vunpack.c.h.b16 %v324
    %v399 = vunpack.c.l.b16 %v325
    %v400 = vunpack.c.h.b16 %v325
    %v401 = vunpack.c.l.b16 %v326
    %v402 = vunpack.c.h.b16 %v326
    %v403 = vunpack.c.l.b16 %v327
    %v404 = vunpack.c.h.b16 %v327
    %v405 = vunpack.c.l.b16 %v328
    %v406 = vunpack.c.h.b16 %v328
    %v407 = vunpack.c.l.b16 %v329
    %v408 = vunpack.c.h.b16 %v329
    %v409 = vunpack.c.l.b16 %v330
    %v410 = vunpack.c.h.b16 %v330
    %v411 = vunpack.c.l.b16 %v331
    %v412 = vunpack.c.h.b16 %v331
    %v413 = vunpack.c.l.b16 %v332
    %v414 = vunpack.c.h.b16 %v332
    %v415 = vunpack.c.l.b16 %v333
    %v416 = vunpack.c.h.b16 %v333
    %v417 = vunpack.c.l.b16 %v334
    %v418 = vunpack.c.h.b16 %v334
    %v419 = vunpack.c.l.b16 %v335
    %v420 = vunpack.c.h.b16 %v335
    %v421 = vunpack.c.l.b16 %v336
    %v422 = vunpack.c.h.b16 %v336
    %v423 = vunpack.c.l.b16 %v337
    %v424 = vunpack.c.h.b16 %v337
    %v425 = vunpack.c.l.b16 %v338
    %v426 = vunpack.c.h.b16 %v338
    %v427 = vunpack.c.l.b16 %v339
    %v428 = vunpack.c.h.b16 %v339
    %v429 = vunpack.c.l.b16 %v340
    %v430 = vunpack.c.h.b16 %v340
    %v431 = vunpack.c.l.b16 %v341
    %v432 = vunpack.c.h.b16 %v341
    %v433 = vunpack.c.l.b16 %v342
    %v434 = vunpack.c.h.b16 %v342
    %v435 = vunpack.c.l.b16 %v343
    %v436 = vunpack.c.h.b16 %v343
    %v437 = vunpack.c.l.b16 %v344
    %v438 = vunpack.c.h.b16 %v344
    %v439 = vunpack.c.l.b16 %v345
    %v440 = vunpack.c.h.b16 %v345
    %v441 = vunpack.c.l.b16 %v346
    %v442 = vunpack.c.h.b16 %v346
    %v443 = vunpack.c.l.b16 %v347
    %v444 = vunpack.c.h.b16 %v347
    %v445 = vunpack.c.l.b16 %v348
    %v446 = vunpack.c.h.b16 %v348
    %v447 = vunpack.c.l.b16 %v349
    %v448 = vunpack.c.h.b16 %v349
    %v449 = vunpack.c.l.b16 %v350
    %v450 = vunpack.c.h.b16 %v350
    %v451 = vunpack.c.l.b16 %v351
    %v452 = vunpack.c.h.b16 %v351
    %v453 = vunpack.c.l.b16 %v352
    %v454 = vunpack.c.h.b16 %v352
    %v455 = vpack.c.b16 %v393, %v391
    %v456 = vpack.c.b16 %v394, %v392
    %v457 = vpack.c.b16 %v397, %v395
    %v458 = vpack.c.b16 %v398, %v396
    %v459 = vpack.c.b16 %v401, %v399
    %v460 = vpack.c.b16 %v402, %v400
    %v461 = vpack.c.b16 %v405, %v403
    %v462 = vpack.c.b16 %v406, %v404
    %v463 = vpack.c.b16 %v409, %v407
    %v464 = vpack.c.b16 %v410, %v408
    %v465 = vpack.c.b16 %v413, %v411
    %v466 = vpack.c.b16 %v414, %v412
    %v467 = vpack.c.b16 %v417, %v415
    %v468 = vpack.c.b16 %v418, %v416
    %v469 = vpack.c.b16 %v421, %v419
    %v470 = vpack.c.b16 %v422, %v420
    %v471 = vpack.c.b16 %v425, %v423
    %v472 = vpack.c.b16 %v426, %v424
    %v473 = vpack.c.b16 %v429, %v427
    %v474 = vpack.c.b16 %v430, %v428
    %v475 = vpack.c.b16 %v433, %v431
    %v476 = vpack.c.b16 %v434, %v432
    %v477 = vpack.c.b16 %v437, %v435
    %v478 = vpack.c.b16 %v438, %v436
    %v479 = vpack.c.b16 %v441, %v439
    %v480 = vpack.c.b16 %v442, %v440
    %v481 = vpack.c.b16 %v445, %v443
    %v482 = vpack.c.b16 %v446, %v444
    %v483 = vpack.c.b16 %v449, %v447
    %v484 = vpack.c.b16 %v450, %v448
    %v485 = vpack.c.b16 %v453, %v451
    %v486 = vpack.c.b16 %v454, %v452
    %519 = vmatpush.bf16.msra.mxu0 %v469
    %520 = vmatpush.bf16.msra.mxu0 %v467
    %521 = vmatpush.bf16.msra.mxu0 %v465
    %522 = vmatpush.bf16.msra.mxu0 %v463
    %523 = vmatpush.bf16.msra.mxu0 %v461
    %524 = vmatpush.bf16.msra.mxu0 %v459
    %525 = vmatpush.bf16.msra.mxu0 %v457
    %526 = vmatpush.bf16.msra.mxu0 %v455
    %527 = vmatmul.bf16.gmra.mxu0 %v319
    %v528 = vpop.f32.mrf.mxu0
    %v529 = vadd.f32 %v355, %v528
    %v530 = vpop.f32.mrf.mxu0
    %531 = vdwg.mxu0
    %532 = vmatpush.bf16.msra.mxu0 %v485
    %533 = vmatpush.bf16.msra.mxu0 %v483
    %534 = vmatpush.bf16.msra.mxu0 %v481
    %535 = vmatpush.bf16.msra.mxu0 %v479
    %536 = vmatpush.bf16.msra.mxu0 %v477
    %537 = vmatpush.bf16.msra.mxu0 %v475
    %538 = vmatpush.bf16.msra.mxu0 %v473
    %539 = vmatpush.bf16.msra.mxu0 %v471
    %540 = vmatmul.bf16.gmra.mxu0 %v320
    %v541 = vpop.f32.mrf.mxu0
    %v542 = vadd.f32 %v529, %v541
    %v543 = vpop.f32.mrf.mxu0
    %544 = vdwg.mxu0
    %545 = vmatpush.bf16.msra.mxu0 %v470
    %546 = vmatpush.bf16.msra.mxu0 %v468
    %547 = vmatpush.bf16.msra.mxu0 %v466
    %548 = vmatpush.bf16.msra.mxu0 %v464
    %549 = vmatpush.bf16.msra.mxu0 %v462
    %550 = vmatpush.bf16.msra.mxu0 %v460
    %551 = vmatpush.bf16.msra.mxu0 %v458
    %552 = vmatpush.bf16.msra.mxu0 %v456
    %553 = vmatmul.bf16.gmra.mxu0 %v319
    %v554 = vpop.f32.mrf.mxu0
    %v555 = vadd.f32 %v356, %v554
    %v556 = vpop.f32.mrf.mxu0
    %557 = vdwg.mxu0
    %558 = vmatpush.bf16.msra.mxu0 %v486
    %559 = vmatpush.bf16.msra.mxu0 %v484
    %560 = vmatpush.bf16.msra.mxu0 %v482
    %561 = vmatpush.bf16.msra.mxu0 %v480
    %562 = vmatpush.bf16.msra.mxu0 %v478
    %563 = vmatpush.bf16.msra.mxu0 %v476
    %564 = vmatpush.bf16.msra.mxu0 %v474
    %565 = vmatpush.bf16.msra.mxu0 %v472
    %566 = vmatmul.bf16.gmra.mxu0 %v320
    %v567 = vpop.f32.mrf.mxu0
    %v568 = vadd.f32 %v555, %v567
    %v569 = vpop.f32.mrf.mxu0
    %570 = vdwg.mxu0
    %v571 = vtanh.pop %v542
    %v572 = vtanh.pop %v568
    %v573 = vpack.c.bf16 %v571, %v571
    %v574 = vpack.c.bf16 %v572, %v572
    %v575 = vld [vmem:[%s6] sm:$0xf]
    %v576 = vld [vmem:[%s6 + $0x4] sm:$0xf]
    %v577 = vld [vmem:[%s6 + $0x8] sm:$0xf]
    %v578 = vld [vmem:[%s6 + $0xc] sm:$0xf]
    %v579 = vld [vmem:[%s6 + $0x10] sm:$0xf]
    %v580 = vld [vmem:[%s6 + $0x14] sm:$0xf]
    %v581 = vld [vmem:[%s6 + $0x18] sm:$0xf]
    %v582 = vld [vmem:[%s6 + $0x1c] sm:$0xf]
    %v583 = vld [vmem:[%s6 + $0x20] sm:$0xf]
    %v584 = vld [vmem:[%s6 + $0x24] sm:$0xf]
    %v585 = vld [vmem:[%s6 + $0x28] sm:$0xf]
    %v586 = vld [vmem:[%s6 + $0x2c] sm:$0xf]
    %v587 = vld [vmem:[%s6 + $0x30] sm:$0xf]
    %v588 = vld [vmem:[%s6 + $0x34] sm:$0xf]
    %v589 = vld [vmem:[%s6 + $0x38] sm:$0xf]
    %v590 = vld [vmem:[%s6 + $0x3c] sm:$0xf]
    %v591 = vld [vmem:[%s6 + $0x40] sm:$0xf]
    %v592 = vld [vmem:[%s6 + $0x44] sm:$0xf]
    %v593 = vld [vmem:[%s6 + $0x48] sm:$0xf]
    %v594 = vld [vmem:[%s6 + $0x4c] sm:$0xf]
    %v595 = vld [vmem:[%s6 + $0x50] sm:$0xf]
    %v596 = vld [vmem:[%s6 + $0x54] sm:$0xf]
    %v597 = vld [vmem:[%s6 + $0x58] sm:$0xf]
    %v598 = vld [vmem:[%s6 + $0x5c] sm:$0xf]
    %v599 = vld [vmem:[%s6 + $0x60] sm:$0xf]
    %v600 = vld [vmem:[%s6 + $0x64] sm:$0xf]
    %v601 = vld [vmem:[%s6 + $0x68] sm:$0xf]
    %v602 = vld [vmem:[%s6 + $0x6c] sm:$0xf]
    %v603 = vld [vmem:[%s6 + $0x70] sm:$0xf]
    %v604 = vld [vmem:[%s6 + $0x74] sm:$0xf]
    %v605 = vld [vmem:[%s6 + $0x78] sm:$0xf]
    %v606 = vld [vmem:[%s6 + $0x7c] sm:$0xf]
    %v607 = vld [vmem:[#allocation10] sm:$0x1]
    %v609 = vperm.slane %v607, 0
    %v643 = vunpack.c.l.b16 %v575
    %v644 = vunpack.c.l.b16 %v576
    %v645 = vunpack.c.l.b16 %v577
    %v646 = vunpack.c.l.b16 %v578
    %v647 = vunpack.c.l.b16 %v579
    %v648 = vunpack.c.l.b16 %v580
    %v649 = vunpack.c.l.b16 %v581
    %v650 = vunpack.c.l.b16 %v582
    %v651 = vunpack.c.l.b16 %v583
    %v652 = vunpack.c.l.b16 %v584
    %v653 = vunpack.c.l.b16 %v585
    %v654 = vunpack.c.l.b16 %v586
    %v655 = vunpack.c.l.b16 %v587
    %v656 = vunpack.c.l.b16 %v588
    %v657 = vunpack.c.l.b16 %v589
    %v658 = vunpack.c.l.b16 %v590
    %v659 = vunpack.c.l.b16 %v591
    %v660 = vunpack.c.l.b16 %v592
    %v661 = vunpack.c.l.b16 %v593
    %v662 = vunpack.c.l.b16 %v594
    %v663 = vunpack.c.l.b16 %v595
    %v664 = vunpack.c.l.b16 %v596
    %v665 = vunpack.c.l.b16 %v597
    %v666 = vunpack.c.l.b16 %v598
    %v667 = vunpack.c.l.b16 %v599
    %v668 = vunpack.c.l.b16 %v600
    %v669 = vunpack.c.l.b16 %v601
    %v670 = vunpack.c.l.b16 %v602
    %v671 = vunpack.c.l.b16 %v603
    %v672 = vunpack.c.l.b16 %v604
    %v673 = vunpack.c.l.b16 %v605
    %v674 = vunpack.c.l.b16 %v606
    %v675 = vpack.c.b16 %v644, %v643
    %v676 = vpack.c.b16 %v646, %v645
    %v677 = vpack.c.b16 %v648, %v647
    %v678 = vpack.c.b16 %v650, %v649
    %v679 = vpack.c.b16 %v652, %v651
    %v680 = vpack.c.b16 %v654, %v653
    %v681 = vpack.c.b16 %v656, %v655
    %v682 = vpack.c.b16 %v658, %v657
    %v683 = vpack.c.b16 %v660, %v659
    %v684 = vpack.c.b16 %v662, %v661
    %v685 = vpack.c.b16 %v664, %v663
    %v686 = vpack.c.b16 %v666, %v665
    %v687 = vpack.c.b16 %v668, %v667
    %v688 = vpack.c.b16 %v670, %v669
    %v689 = vpack.c.b16 %v672, %v671
    %v690 = vpack.c.b16 %v674, %v673
    %707 = vmatpush.bf16.msra.mxu0 %v682
    %708 = vmatpush.bf16.msra.mxu0 %v681
    %709 = vmatpush.bf16.msra.mxu0 %v680
    %710 = vmatpush.bf16.msra.mxu0 %v679
    %711 = vmatpush.bf16.msra.mxu0 %v678
    %712 = vmatpush.bf16.msra.mxu0 %v677
    %713 = vmatpush.bf16.msra.mxu0 %v676
    %714 = vmatpush.bf16.msra.mxu0 %v675
    %715 = vmatmul.bf16.gmra.mxu0 %v573
    %v716 = vpop.f32.mrf.mxu0
    %v717 = vadd.f32 %v609, %v716
    %v718 = vpop.f32.mrf.mxu0
    %719 = vdwg.mxu0
    %720 = vmatpush.bf16.msra.mxu0 %v690
    %721 = vmatpush.bf16.msra.mxu0 %v689
    %722 = vmatpush.bf16.msra.mxu0 %v688
    %723 = vmatpush.bf16.msra.mxu0 %v687
    %724 = vmatpush.bf16.msra.mxu0 %v686
    %725 = vmatpush.bf16.msra.mxu0 %v685
    %726 = vmatpush.bf16.msra.mxu0 %v684
    %727 = vmatpush.bf16.msra.mxu0 %v683
    %728 = vmatmul.bf16.gmra.mxu0 %v574
    %v729 = vpop.f32.mrf.mxu0
    %v730 = vadd.f32 %v717, %v729
    %v731 = vpop.f32.mrf.mxu0
    %732 = vdwg.mxu0
    %v733 = vld [vmem:[%s8] sm:$0xf]
    %v734 = vld [vmem:[%s8 + $0x4] sm:$0xf]
    %v735 = vld [vmem:[%s8 + $0x8] sm:$0xf]
    %v736 = vld [vmem:[%s8 + $0xc] sm:$0xf]
    %v737 = vld [vmem:[%s8 + $0x10] sm:$0xf]
    %v738 = vld [vmem:[%s8 + $0x14] sm:$0xf]
    %v739 = vld [vmem:[%s8 + $0x18] sm:$0xf]
    %v740 = vld [vmem:[%s8 + $0x1c] sm:$0xf]
    %v741 = vld [vmem:[%s8 + $0x20] sm:$0xf]
    %v742 = vld [vmem:[%s8 + $0x24] sm:$0xf]
    %v743 = vld [vmem:[%s8 + $0x28] sm:$0xf]
    %v744 = vld [vmem:[%s8 + $0x2c] sm:$0xf]
    %v745 = vld [vmem:[%s8 + $0x30] sm:$0xf]
    %v746 = vld [vmem:[%s8 + $0x34] sm:$0xf]
    %v747 = vld [vmem:[%s8 + $0x38] sm:$0xf]
    %v748 = vld [vmem:[%s8 + $0x3c] sm:$0xf]
    %v749 = vld [vmem:[%s8 + $0x40] sm:$0xf]
    %v750 = vld [vmem:[%s8 + $0x44] sm:$0xf]
    %v751 = vld [vmem:[%s8 + $0x48] sm:$0xf]
    %v752 = vld [vmem:[%s8 + $0x4c] sm:$0xf]
    %v753 = vld [vmem:[%s8 + $0x50] sm:$0xf]
    %v754 = vld [vmem:[%s8 + $0x54] sm:$0xf]
    %v755 = vld [vmem:[%s8 + $0x58] sm:$0xf]
    %v756 = vld [vmem:[%s8 + $0x5c] sm:$0xf]
    %v757 = vld [vmem:[%s8 + $0x60] sm:$0xf]
    %v758 = vld [vmem:[%s8 + $0x64] sm:$0xf]
    %v759 = vld [vmem:[%s8 + $0x68] sm:$0xf]
    %v760 = vld [vmem:[%s8 + $0x6c] sm:$0xf]
    %v761 = vld [vmem:[%s8 + $0x70] sm:$0xf]
    %v762 = vld [vmem:[%s8 + $0x74] sm:$0xf]
    %v763 = vld [vmem:[%s8 + $0x78] sm:$0xf]
    %v764 = vld [vmem:[%s8 + $0x7c] sm:$0xf]
    %v765 = vld [vmem:[#allocation11] sm:$0x1]
    %v767 = vperm.slane %v765, 0
    %v801 = vunpack.c.l.b16 %v733
    %v802 = vunpack.c.l.b16 %v734
    %v803 = vunpack.c.l.b16 %v735
    %v804 = vunpack.c.l.b16 %v736
    %v805 = vunpack.c.l.b16 %v737
    %v806 = vunpack.c.l.b16 %v738
    %v807 = vunpack.c.l.b16 %v739
    %v808 = vunpack.c.l.b16 %v740
    %v809 = vunpack.c.l.b16 %v741
    %v810 = vunpack.c.l.b16 %v742
    %v811 = vunpack.c.l.b16 %v743
    %v812 = vunpack.c.l.b16 %v744
    %v813 = vunpack.c.l.b16 %v745
    %v814 = vunpack.c.l.b16 %v746
    %v815 = vunpack.c.l.b16 %v747
    %v816 = vunpack.c.l.b16 %v748
    %v817 = vunpack.c.l.b16 %v749
    %v818 = vunpack.c.l.b16 %v750
    %v819 = vunpack.c.l.b16 %v751
    %v820 = vunpack.c.l.b16 %v752
    %v821 = vunpack.c.l.b16 %v753
    %v822 = vunpack.c.l.b16 %v754
    %v823 = vunpack.c.l.b16 %v755
    %v824 = vunpack.c.l.b16 %v756
    %v825 = vunpack.c.l.b16 %v757
    %v826 = vunpack.c.l.b16 %v758
    %v827 = vunpack.c.l.b16 %v759
    %v828 = vunpack.c.l.b16 %v760
    %v829 = vunpack.c.l.b16 %v761
    %v830 = vunpack.c.l.b16 %v762
    %v831 = vunpack.c.l.b16 %v763
    %v832 = vunpack.c.l.b16 %v764
    %v833 = vpack.c.b16 %v802, %v801
    %v834 = vpack.c.b16 %v804, %v803
    %v835 = vpack.c.b16 %v806, %v805
    %v836 = vpack.c.b16 %v808, %v807
    %v837 = vpack.c.b16 %v810, %v809
    %v838 = vpack.c.b16 %v812, %v811
    %v839 = vpack.c.b16 %v814, %v813
    %v840 = vpack.c.b16 %v816, %v815
    %v841 = vpack.c.b16 %v818, %v817
    %v842 = vpack.c.b16 %v820, %v819
    %v843 = vpack.c.b16 %v822, %v821
    %v844 = vpack.c.b16 %v824, %v823
    %v845 = vpack.c.b16 %v826, %v825
    %v846 = vpack.c.b16 %v828, %v827
    %v847 = vpack.c.b16 %v830, %v829
    %v848 = vpack.c.b16 %v832, %v831
    %865 = vmatpush.bf16.msra.mxu0 %v840
    %866 = vmatpush.bf16.msra.mxu0 %v839
    %867 = vmatpush.bf16.msra.mxu0 %v838
    %868 = vmatpush.bf16.msra.mxu0 %v837
    %869 = vmatpush.bf16.msra.mxu0 %v836
    %870 = vmatpush.bf16.msra.mxu0 %v835
    %871 = vmatpush.bf16.msra.mxu0 %v834
    %872 = vmatpush.bf16.msra.mxu0 %v833
    %873 = vmatmul.bf16.gmra.mxu0 %v573
    %v874 = vpop.f32.mrf.mxu0
    %v875 = vadd.f32 %v767, %v874
    %v876 = vpop.f32.mrf.mxu0
    %877 = vdwg.mxu0
    %878 = vmatpush.bf16.msra.mxu0 %v848
    %879 = vmatpush.bf16.msra.mxu0 %v847
    %880 = vmatpush.bf16.msra.mxu0 %v846
    %881 = vmatpush.bf16.msra.mxu0 %v845
    %882 = vmatpush.bf16.msra.mxu0 %v844
    %883 = vmatpush.bf16.msra.mxu0 %v843
    %884 = vmatpush.bf16.msra.mxu0 %v842
    %885 = vmatpush.bf16.msra.mxu0 %v841
    %886 = vmatmul.bf16.gmra.mxu0 %v574
    %v887 = vpop.f32.mrf.mxu0
    %v888 = vadd.f32 %v875, %v887
    %v889 = vpop.f32.mrf.mxu0
    %890 = vdwg.mxu0
    %v891 = vmul.f32 %v888, 1.442695
    %v892 = vpow.pop %v891
    %v893 = vld [vmem:[#allocation2] sm:$0xff]
    %v894 = vmul.f32 %v892, %v893
    %v895 = vadd.f32 %v730, %v894
    %v896 = vpack.c.bf16 %v895, %v895
    %v897 = vld [vmem:[%s10] sm:$0xff]
    %v898 = vld [vmem:[#allocation13] sm:$0x3]
    %v900 = vperm.slane %v898, 0
    %v901 = vperm.slane %v898, 1
    %v905 = vunpack.c.l.b16 %v897
    %v906 = vunpack.c.h.b16 %v897
    %v907 = vpack.c.b16 %v905, %v905
    %v908 = vpack.c.b16 %v906, %v906
    %vm909 = vcmask 64512
    %v911 = vsel %vm909, %v896, 0
    %vm913 = vcmask 1043456
    %v915 = vsel %vm913, %v907, 0
    %v918 = vsel %vm913, %v908, 0
    %920 = vmatpush.bf16.msra.mxu0 0
    %921 = vmatpush.bf16.msra.mxu0 0
    %922 = vmatpush.bf16.msra.mxu0 0
    %923 = vmatpush.bf16.msra.mxu0 0
    %924 = vmatpush.bf16.msra.mxu0 0
    %925 = vmatpush.bf16.msra.mxu0 0
    %926 = vmatpush.bf16.msra.mxu0 0
    %927 = vmatpush.bf16.msra.mxu0 %v915
    %928 = vmatmul.bf16.gmra.mxu0 %v911
    %v929 = vpop.f32.mrf.mxu0
    %v930 = vadd.f32 %v900, %v929
    %v931 = vpop.f32.mrf.mxu0
    %932 = vdwg.mxu0
    %933 = vmatpush.bf16.msra.mxu0 0
    %934 = vmatpush.bf16.msra.mxu0 0
    %935 = vmatpush.bf16.msra.mxu0 0
    %936 = vmatpush.bf16.msra.mxu0 0
    %937 = vmatpush.bf16.msra.mxu0 0
    %938 = vmatpush.bf16.msra.mxu0 0
    %939 = vmatpush.bf16.msra.mxu0 0
    %940 = vmatpush.bf16.msra.mxu0 %v918
    %941 = vmatmul.bf16.gmra.mxu0 %v911
    %v942 = vpop.f32.mrf.mxu0
    %v943 = vadd.f32 %v901, %v942
    %v944 = vpop.f32.mrf.mxu0
    %945 = vdwg.mxu0
    %v946 = vtanh.pop %v930
    %v947 = vtanh.pop %v943
    %v948 = vpack.c.bf16 %v946, %v946
    %v949 = vpack.c.bf16 %v947, %v947
    %v950 = vld [vmem:[#allocation14] sm:$0xff]
    %v951 = vld [vmem:[#allocation14 + $0x8] sm:$0xff]
    %v952 = vld [vmem:[#allocation14 + $0x10] sm:$0xff]
    %v953 = vld [vmem:[#allocation14 + $0x18] sm:$0xff]
    %v954 = vld [vmem:[#allocation14 + $0x20] sm:$0xff]
    %v955 = vld [vmem:[#allocation14 + $0x28] sm:$0xff]
    %v956 = vld [vmem:[#allocation14 + $0x30] sm:$0xff]
    %v957 = vld [vmem:[#allocation14 + $0x38] sm:$0xff]
    %v958 = vld [vmem:[#allocation14 + $0x40] sm:$0xff]
    %v959 = vld [vmem:[#allocation14 + $0x48] sm:$0xff]
    %v960 = vld [vmem:[#allocation14 + $0x50] sm:$0xff]
    %v961 = vld [vmem:[#allocation14 + $0x58] sm:$0xff]
    %v962 = vld [vmem:[#allocation14 + $0x60] sm:$0xff]
    %v963 = vld [vmem:[#allocation14 + $0x68] sm:$0xff]
    %v964 = vld [vmem:[#allocation14 + $0x70] sm:$0xff]
    %v965 = vld [vmem:[#allocation14 + $0x78] sm:$0xff]
    %v966 = vld [vmem:[#allocation14 + $0x80] sm:$0xff]
    %v967 = vld [vmem:[#allocation14 + $0x88] sm:$0xff]
    %v968 = vld [vmem:[#allocation14 + $0x90] sm:$0xff]
    %v969 = vld [vmem:[#allocation14 + $0x98] sm:$0xff]
    %v970 = vld [vmem:[#allocation14 + $0xa0] sm:$0xff]
    %v971 = vld [vmem:[#allocation14 + $0xa8] sm:$0xff]
    %v972 = vld [vmem:[#allocation14 + $0xb0] sm:$0xff]
    %v973 = vld [vmem:[#allocation14 + $0xb8] sm:$0xff]
    %v974 = vld [vmem:[#allocation14 + $0xc0] sm:$0xff]
    %v975 = vld [vmem:[#allocation14 + $0xc8] sm:$0xff]
    %v976 = vld [vmem:[#allocation14 + $0xd0] sm:$0xff]
    %v977 = vld [vmem:[#allocation14 + $0xd8] sm:$0xff]
    %v978 = vld [vmem:[#allocation14 + $0xe0] sm:$0xff]
    %v979 = vld [vmem:[#allocation14 + $0xe8] sm:$0xff]
    %v980 = vld [vmem:[#allocation14 + $0xf0] sm:$0xff]
    %v981 = vld [vmem:[#allocation14 + $0xf8] sm:$0xff]
    %v982 = vld [vmem:[%s13] sm:$0x3]
    %v984 = vperm.slane %v982, 0
    %v985 = vperm.slane %v982, 1
    %v1020 = vunpack.c.l.b16 %v950
    %v1021 = vunpack.c.h.b16 %v950
    %v1022 = vunpack.c.l.b16 %v951
    %v1023 = vunpack.c.h.b16 %v951
    %v1024 = vunpack.c.l.b16 %v952
    %v1025 = vunpack.c.h.b16 %v952
    %v1026 = vunpack.c.l.b16 %v953
    %v1027 = vunpack.c.h.b16 %v953
    %v1028 = vunpack.c.l.b16 %v954
    %v1029 = vunpack.c.h.b16 %v954
    %v1030 = vunpack.c.l.b16 %v955
    %v1031 = vunpack.c.h.b16 %v955
    %v1032 = vunpack.c.l.b16 %v956
    %v1033 = vunpack.c.h.b16 %v956
    %v1034 = vunpack.c.l.b16 %v957
    %v1035 = vunpack.c.h.b16 %v957
    %v1036 = vunpack.c.l.b16 %v958
    %v1037 = vunpack.c.h.b16 %v958
    %v1038 = vunpack.c.l.b16 %v959
    %v1039 = vunpack.c.h.b16 %v959
    %v1040 = vunpack.c.l.b16 %v960
    %v1041 = vunpack.c.h.b16 %v960
    %v1042 = vunpack.c.l.b16 %v961
    %v1043 = vunpack.c.h.b16 %v961
    %v1044 = vunpack.c.l.b16 %v962
    %v1045 = vunpack.c.h.b16 %v962
    %v1046 = vunpack.c.l.b16 %v963
    %v1047 = vunpack.c.h.b16 %v963
    %v1048 = vunpack.c.l.b16 %v964
    %v1049 = vunpack.c.h.b16 %v964
    %v1050 = vunpack.c.l.b16 %v965
    %v1051 = vunpack.c.h.b16 %v965
    %v1052 = vunpack.c.l.b16 %v966
    %v1053 = vunpack.c.h.b16 %v966
    %v1054 = vunpack.c.l.b16 %v967
    %v1055 = vunpack.c.h.b16 %v967
    %v1056 = vunpack.c.l.b16 %v968
    %v1057 = vunpack.c.h.b16 %v968
    %v1058 = vunpack.c.l.b16 %v969
    %v1059 = vunpack.c.h.b16 %v969
    %v1060 = vunpack.c.l.b16 %v970
    %v1061 = vunpack.c.h.b16 %v970
    %v1062 = vunpack.c.l.b16 %v971
    %v1063 = vunpack.c.h.b16 %v971
    %v1064 = vunpack.c.l.b16 %v972
    %v1065 = vunpack.c.h.b16 %v972
    %v1066 = vunpack.c.l.b16 %v973
    %v1067 = vunpack.c.h.b16 %v973
    %v1068 = vunpack.c.l.b16 %v974
    %v1069 = vunpack.c.h.b16 %v974
    %v1070 = vunpack.c.l.b16 %v975
    %v1071 = vunpack.c.h.b16 %v975
    %v1072 = vunpack.c.l.b16 %v976
    %v1073 = vunpack.c.h.b16 %v976
    %v1074 = vunpack.c.l.b16 %v977
    %v1075 = vunpack.c.h.b16 %v977
    %v1076 = vunpack.c.l.b16 %v978
    %v1077 = vunpack.c.h.b16 %v978
    %v1078 = vunpack.c.l.b16 %v979
    %v1079 = vunpack.c.h.b16 %v979
    %v1080 = vunpack.c.l.b16 %v980
    %v1081 = vunpack.c.h.b16 %v980
    %v1082 = vunpack.c.l.b16 %v981
    %v1083 = vunpack.c.h.b16 %v981
    %v1084 = vpack.c.b16 %v1022, %v1020
    %v1085 = vpack.c.b16 %v1023, %v1021
    %v1086 = vpack.c.b16 %v1026, %v1024
    %v1087 = vpack.c.b16 %v1027, %v1025
    %v1088 = vpack.c.b16 %v1030, %v1028
    %v1089 = vpack.c.b16 %v1031, %v1029
    %v1090 = vpack.c.b16 %v1034, %v1032
    %v1091 = vpack.c.b16 %v1035, %v1033
    %v1092 = vpack.c.b16 %v1038, %v1036
    %v1093 = vpack.c.b16 %v1039, %v1037
    %v1094 = vpack.c.b16 %v1042, %v1040
    %v1095 = vpack.c.b16 %v1043, %v1041
    %v1096 = vpack.c.b16 %v1046, %v1044
    %v1097 = vpack.c.b16 %v1047, %v1045
    %v1098 = vpack.c.b16 %v1050, %v1048
    %v1099 = vpack.c.b16 %v1051, %v1049
    %v1100 = vpack.c.b16 %v1054, %v1052
    %v1101 = vpack.c.b16 %v1055, %v1053
    %v1102 = vpack.c.b16 %v1058, %v1056
    %v1103 = vpack.c.b16 %v1059, %v1057
    %v1104 = vpack.c.b16 %v1062, %v1060
    %v1105 = vpack.c.b16 %v1063, %v1061
    %v1106 = vpack.c.b16 %v1066, %v1064
    %v1107 = vpack.c.b16 %v1067, %v1065
    %v1108 = vpack.c.b16 %v1070, %v1068
    %v1109 = vpack.c.b16 %v1071, %v1069
    %v1110 = vpack.c.b16 %v1074, %v1072
    %v1111 = vpack.c.b16 %v1075, %v1073
    %v1112 = vpack.c.b16 %v1078, %v1076
    %v1113 = vpack.c.b16 %v1079, %v1077
    %v1114 = vpack.c.b16 %v1082, %v1080
    %v1115 = vpack.c.b16 %v1083, %v1081
    %1148 = vmatpush.bf16.msra.mxu0 %v1098
    %1149 = vmatpush.bf16.msra.mxu0 %v1096
    %1150 = vmatpush.bf16.msra.mxu0 %v1094
    %1151 = vmatpush.bf16.msra.mxu0 %v1092
    %1152 = vmatpush.bf16.msra.mxu0 %v1090
    %1153 = vmatpush.bf16.msra.mxu0 %v1088
    %1154 = vmatpush.bf16.msra.mxu0 %v1086
    %1155 = vmatpush.bf16.msra.mxu0 %v1084
    %1156 = vmatmul.bf16.gmra.mxu0 %v948
    %v1157 = vpop.f32.mrf.mxu0
    %v1158 = vadd.f32 %v984, %v1157
    %v1159 = vpop.f32.mrf.mxu0
    %1160 = vdwg.mxu0
    %1161 = vmatpush.bf16.msra.mxu0 %v1114
    %1162 = vmatpush.bf16.msra.mxu0 %v1112
    %1163 = vmatpush.bf16.msra.mxu0 %v1110
    %1164 = vmatpush.bf16.msra.mxu0 %v1108
    %1165 = vmatpush.bf16.msra.mxu0 %v1106
    %1166 = vmatpush.bf16.msra.mxu0 %v1104
    %1167 = vmatpush.bf16.msra.mxu0 %v1102
    %1168 = vmatpush.bf16.msra.mxu0 %v1100
    %1169 = vmatmul.bf16.gmra.mxu0 %v949
    %v1170 = vpop.f32.mrf.mxu0
    %v1171 = vadd.f32 %v1158, %v1170
    %v1172 = vpop.f32.mrf.mxu0
    %1173 = vdwg.mxu0
    %1174 = vmatpush.bf16.msra.mxu0 %v1099
    %1175 = vmatpush.bf16.msra.mxu0 %v1097
    %1176 = vmatpush.bf16.msra.mxu0 %v1095
    %1177 = vmatpush.bf16.msra.mxu0 %v1093
    %1178 = vmatpush.bf16.msra.mxu0 %v1091
    %1179 = vmatpush.bf16.msra.mxu0 %v1089
    %1180 = vmatpush.bf16.msra.mxu0 %v1087
    %1181 = vmatpush.bf16.msra.mxu0 %v1085
    %1182 = vmatmul.bf16.gmra.mxu0 %v948
    %v1183 = vpop.f32.mrf.mxu0
    %v1184 = vadd.f32 %v985, %v1183
    %v1185 = vpop.f32.mrf.mxu0
    %1186 = vdwg.mxu0
    %1187 = vmatpush.bf16.msra.mxu0 %v1115
    %1188 = vmatpush.bf16.msra.mxu0 %v1113
    %1189 = vmatpush.bf16.msra.mxu0 %v1111
    %1190 = vmatpush.bf16.msra.mxu0 %v1109
    %1191 = vmatpush.bf16.msra.mxu0 %v1107
    %1192 = vmatpush.bf16.msra.mxu0 %v1105
    %1193 = vmatpush.bf16.msra.mxu0 %v1103
    %1194 = vmatpush.bf16.msra.mxu0 %v1101
    %1195 = vmatmul.bf16.gmra.mxu0 %v949
    %v1196 = vpop.f32.mrf.mxu0
    %v1197 = vadd.f32 %v1184, %v1196
    %v1198 = vpop.f32.mrf.mxu0
    %1199 = vdwg.mxu0
    %v1200 = vtanh.pop %v1171
    %v1201 = vtanh.pop %v1197
    %v1202 = vpack.c.bf16 %v1200, %v1200
    %v1203 = vpack.c.bf16 %v1201, %v1201
    %v1204 = vld [vmem:[#allocation16] sm:$0xf]
    %v1205 = vld [vmem:[#allocation16 + $0x4] sm:$0xf]
    %v1206 = vld [vmem:[#allocation16 + $0x8] sm:$0xf]
    %v1207 = vld [vmem:[#allocation16 + $0xc] sm:$0xf]
    %v1208 = vld [vmem:[#allocation16 + $0x10] sm:$0xf]
    %v1209 = vld [vmem:[#allocation16 + $0x14] sm:$0xf]
    %v1210 = vld [vmem:[#allocation16 + $0x18] sm:$0xf]
    %v1211 = vld [vmem:[#allocation16 + $0x1c] sm:$0xf]
    %v1212 = vld [vmem:[#allocation16 + $0x20] sm:$0xf]
    %v1213 = vld [vmem:[#allocation16 + $0x24] sm:$0xf]
    %v1214 = vld [vmem:[#allocation16 + $0x28] sm:$0xf]
    %v1215 = vld [vmem:[#allocation16 + $0x2c] sm:$0xf]
    %v1216 = vld [vmem:[#allocation16 + $0x30] sm:$0xf]
    %v1217 = vld [vmem:[#allocation16 + $0x34] sm:$0xf]
    %v1218 = vld [vmem:[#allocation16 + $0x38] sm:$0xf]
    %v1219 = vld [vmem:[#allocation16 + $0x3c] sm:$0xf]
    %v1220 = vld [vmem:[#allocation16 + $0x40] sm:$0xf]
    %v1221 = vld [vmem:[#allocation16 + $0x44] sm:$0xf]
    %v1222 = vld [vmem:[#allocation16 + $0x48] sm:$0xf]
    %v1223 = vld [vmem:[#allocation16 + $0x4c] sm:$0xf]
    %v1224 = vld [vmem:[#allocation16 + $0x50] sm:$0xf]
    %v1225 = vld [vmem:[#allocation16 + $0x54] sm:$0xf]
    %v1226 = vld [vmem:[#allocation16 + $0x58] sm:$0xf]
    %v1227 = vld [vmem:[#allocation16 + $0x5c] sm:$0xf]
    %v1228 = vld [vmem:[#allocation16 + $0x60] sm:$0xf]
    %v1229 = vld [vmem:[#allocation16 + $0x64] sm:$0xf]
    %v1230 = vld [vmem:[#allocation16 + $0x68] sm:$0xf]
    %v1231 = vld [vmem:[#allocation16 + $0x6c] sm:$0xf]
    %v1232 = vld [vmem:[#allocation16 + $0x70] sm:$0xf]
    %v1233 = vld [vmem:[#allocation16 + $0x74] sm:$0xf]
    %v1234 = vld [vmem:[#allocation16 + $0x78] sm:$0xf]
    %v1235 = vld [vmem:[#allocation16 + $0x7c] sm:$0xf]
    %v1236 = vld [vmem:[%s15] sm:$0x1]
    %v1238 = vperm.slane %v1236, 0
    %v1272 = vunpack.c.l.b16 %v1204
    %v1273 = vunpack.c.l.b16 %v1205
    %v1274 = vunpack.c.l.b16 %v1206
    %v1275 = vunpack.c.l.b16 %v1207
    %v1276 = vunpack.c.l.b16 %v1208
    %v1277 = vunpack.c.l.b16 %v1209
    %v1278 = vunpack.c.l.b16 %v1210
    %v1279 = vunpack.c.l.b16 %v1211
    %v1280 = vunpack.c.l.b16 %v1212
    %v1281 = vunpack.c.l.b16 %v1213
    %v1282 = vunpack.c.l.b16 %v1214
    %v1283 = vunpack.c.l.b16 %v1215
    %v1284 = vunpack.c.l.b16 %v1216
    %v1285 = vunpack.c.l.b16 %v1217
    %v1286 = vunpack.c.l.b16 %v1218
    %v1287 = vunpack.c.l.b16 %v1219
    %v1288 = vunpack.c.l.b16 %v1220
    %v1289 = vunpack.c.l.b16 %v1221
    %v1290 = vunpack.c.l.b16 %v1222
    %v1291 = vunpack.c.l.b16 %v1223
    %v1292 = vunpack.c.l.b16 %v1224
    %v1293 = vunpack.c.l.b16 %v1225
    %v1294 = vunpack.c.l.b16 %v1226
    %v1295 = vunpack.c.l.b16 %v1227
    %v1296 = vunpack.c.l.b16 %v1228
    %v1297 = vunpack.c.l.b16 %v1229
    %v1298 = vunpack.c.l.b16 %v1230
    %v1299 = vunpack.c.l.b16 %v1231
    %v1300 = vunpack.c.l.b16 %v1232
    %v1301 = vunpack.c.l.b16 %v1233
    %v1302 = vunpack.c.l.b16 %v1234
    %v1303 = vunpack.c.l.b16 %v1235
    %v1304 = vpack.c.b16 %v1273, %v1272
    %v1305 = vpack.c.b16 %v1275, %v1274
    %v1306 = vpack.c.b16 %v1277, %v1276
    %v1307 = vpack.c.b16 %v1279, %v1278
    %v1308 = vpack.c.b16 %v1281, %v1280
    %v1309 = vpack.c.b16 %v1283, %v1282
    %v1310 = vpack.c.b16 %v1285, %v1284
    %v1311 = vpack.c.b16 %v1287, %v1286
    %v1312 = vpack.c.b16 %v1289, %v1288
    %v1313 = vpack.c.b16 %v1291, %v1290
    %v1314 = vpack.c.b16 %v1293, %v1292
    %v1315 = vpack.c.b16 %v1295, %v1294
    %v1316 = vpack.c.b16 %v1297, %v1296
    %v1317 = vpack.c.b16 %v1299, %v1298
    %v1318 = vpack.c.b16 %v1301, %v1300
    %v1319 = vpack.c.b16 %v1303, %v1302
    %1336 = vmatpush.bf16.msra.mxu0 %v1311
    %1337 = vmatpush.bf16.msra.mxu0 %v1310
    %1338 = vmatpush.bf16.msra.mxu0 %v1309
    %1339 = vmatpush.bf16.msra.mxu0 %v1308
    %1340 = vmatpush.bf16.msra.mxu0 %v1307
    %1341 = vmatpush.bf16.msra.mxu0 %v1306
    %1342 = vmatpush.bf16.msra.mxu0 %v1305
    %1343 = vmatpush.bf16.msra.mxu0 %v1304
    %1344 = vmatmul.bf16.gmra.mxu0 %v1202
    %v1345 = vpop.f32.mrf.mxu0
    %v1346 = vadd.f32 %v1238, %v1345
    %v1347 = vpop.f32.mrf.mxu0
    %1348 = vdwg.mxu0
    %1349 = vmatpush.bf16.msra.mxu0 %v1319
    %1350 = vmatpush.bf16.msra.mxu0 %v1318
    %1351 = vmatpush.bf16.msra.mxu0 %v1317
    %1352 = vmatpush.bf16.msra.mxu0 %v1316
    %1353 = vmatpush.bf16.msra.mxu0 %v1315
    %1354 = vmatpush.bf16.msra.mxu0 %v1314
    %1355 = vmatpush.bf16.msra.mxu0 %v1313
    %1356 = vmatpush.bf16.msra.mxu0 %v1312
    %1357 = vmatmul.bf16.gmra.mxu0 %v1203
    %v1358 = vpop.f32.mrf.mxu0
    %v1359 = vadd.f32 %v1346, %v1358
    %v1360 = vpop.f32.mrf.mxu0
    %1361 = vdwg.mxu0
    %v1362 = vand.u32 2147483647, %v1359
    %v1363 = vsub.f32 0.0, %v1362
    %v1364 = vmul.f32 %v1363, 1.442695
    %v1365 = vpow.pop %v1364
    %v1366 = vmul.f32 %v187, %v1359
    %v1367 = vmax.f32 %v1359, 0.0
    %v1368 = vadd.f32 %v1365, 1.0
    %v1369 = vlog2.pop %v1368
    %v1370 = vmul.f32 %v1369, 0.6931472
    %v1371 = vadd.f32 %v1367, %v1370
    %v1372 = vsub.f32 %v1366, %v1371
    %v1373 = vlaneseq
    %v1374 = vand.u32 %v1373, 127
    %vm1375 = vcmp.lt.s32.totalorder %v1374, 16
    %v1376 = vsel %vm1375, 1, 0
    %v1377 = vcvt.s32.f32 %v1376
    %v1378 = vmul.f32 %v1372, %v1377
    %1379 = vadd.xlane.f32.xlu0 %v1378
    %v1380 = vpop.xlane.xlu0 %1379
    %v1381 = vmul.f32 %v730, %v730
    %v1382 = vmul.f32 %v892, %v892
    %v1383 = vadd.f32 %v1381, %v1382
    %v1384 = vsub.f32 %v1383, 1.0
    %v1385 = vmul.f32 %v888, 2.0
    %v1386 = vsub.f32 %v1384, %v1385
    %v1387 = vsel %vm909, %v1386, 0.0
    %1388 = vadd.xlane.f32.xlu0 %v1387
    %v1389 = vpop.xlane.xlu0 %1388
    %v1390 = vmul.f32 %v1389, 0.5
    %v1391 = vsub.f32 0.0, %v1380
    %v1392 = vadd.f32 %v1391, %v1390
    %1393 = vst.msk [vmem:[#allocation17] sm:$0xff] %vm909, %v730
    %1394 = vst.msk [vmem:[#allocation18] sm:$0xff] %vm909, %v888
    %1395 = vst [vmem:[#allocation20] sm:$0xff] %v1392
    // Predicated region
    $region102: #{tpu_custom_call.1} parent=1 // pred_check
      _
    $region103: #{tpu_custom_call.1} parent=1 // pred_check_branch
      %1397 = sbr.rel (0) target = $region105
    $region104: #{tpu_custom_call.1} parent=1 // pred_region
      %1399 = vsyncadd [#allocation4], 0
      %s1401 = sshll.u32 [#allocation17], 4
      %s1402 = int_to_ptr.vmem [resolvable:$true] %s1401
      %s1403 = sshll.u32 %s16, 4
      %s1404 = int_to_ptr.hbm [resolvable:$true] %s1403
      %1406 = dma.vmem_to_hbm [thread:$0]  %s1402, 128, %s1404, [#allocation4]
    $region105: #{tpu_custom_call.1} parent=1 // pred_fallthru
      _
    // Predicated region
    $region106: #{tpu_custom_call.1} parent=1 // pred_check
      _
    $region107: #{tpu_custom_call.1} parent=1 // pred_check_branch
      %1408 = sbr.rel (0) target = $region109
    $region108: #{tpu_custom_call.1} parent=1 // pred_region
      %1410 = vsyncadd [#allocation19], 0
      %s1412 = sshll.u32 [#allocation18], 4
      %s1413 = int_to_ptr.vmem [resolvable:$true] %s1412
      %s1414 = sshll.u32 %s17, 4
      %s1415 = int_to_ptr.hbm [resolvable:$true] %s1414
      %1417 = dma.vmem_to_hbm [thread:$0]  %s1413, 128, %s1415, [#allocation19]
    $region109: #{tpu_custom_call.1} parent=1 // pred_fallthru
      _
    // Predicated region
    $region110: #{tpu_custom_call.1} parent=1 // pred_check
      _
    $region111: #{tpu_custom_call.1} parent=1 // pred_check_branch
      %1419 = sbr.rel (0) target = $region113
    $region112: #{tpu_custom_call.1} parent=1 // pred_region
      %1421 = vsyncadd [#allocation19], 0
      %s1423 = sshll.u32 [#allocation20], 4
      %s1424 = int_to_ptr.vmem [resolvable:$true] %s1423
      %s1425 = sshll.u32 %s18, 4
      %s1426 = int_to_ptr.hbm [resolvable:$true] %s1425
      %1428 = dma.vmem_to_hbm [thread:$0]  %s1424, 128, %s1426, [#allocation19]
    $region113: #{tpu_custom_call.1} parent=1 // pred_fallthru
      _
    // Predicated region
    $region114: #{tpu_custom_call.1} parent=1 // pred_check
      _
    $region115: #{tpu_custom_call.1} parent=1 // pred_check_branch
      %1430 = sbr.rel (0) target = $region117
    $region116: #{tpu_custom_call.1} parent=1 // pred_region
      %1432 = dma.done [#allocation4], 128
    $region117: #{tpu_custom_call.1} parent=1 // pred_fallthru
      _
    // Predicated region
    $region118: #{tpu_custom_call.1} parent=1 // pred_check
      _
    $region119: #{tpu_custom_call.1} parent=1 // pred_check_branch
      %1434 = sbr.rel (0) target = $region121
    $region120: #{tpu_custom_call.1} parent=1 // pred_region
      %1436 = dma.done [#allocation19], 128
    $region121: #{tpu_custom_call.1} parent=1 // pred_fallthru
      _
    // Predicated region
    $region122: #{tpu_custom_call.1} parent=1 // pred_check
      _
    $region123: #{tpu_custom_call.1} parent=1 // pred_check_branch
      %1438 = sbr.rel (0) target = $region125
    $region124: #{tpu_custom_call.1} parent=1 // pred_region
      %1440 = dma.done [#allocation19], 128
    $region125: #{tpu_custom_call.1} parent=1 // pred_fallthru
      _
    %1441 = vsyncpa [#allocation3], 1
    %1442 = vsyncpa [#allocation6], 1
    %1443 = vsyncpa [#allocation9], 1
    %1444 = vsyncpa [#allocation12], 1
    %1445 = vsyncpa [#allocation15], 1
    %1446 = vsyncpa [#allocation4], 1
    %1447 = vsyncpa [#allocation19], 1

</llo_original>
